<compile_context>
chip_gen: v6e
topology: v6e:2x2x1
jax: 0.10.0
libtpu: 0.0.40
codegen_flags: <defaults>
</compile_context>

<pallas_src>
import functools
import math

import jax
import jax.numpy as jnp
from jax.experimental import pallas as pl
from jax.experimental.pallas import tpu as pltpu

# bf16 operands are the native MXU input format on v5e/v6e/v7x; accumulation is
# always f32 via preferred_element_type.  Non-matmul math stays f32.
_MXU_DTYPE = jnp.bfloat16

# Row layout of the packed small-parameter slab (all f32).
_ROW_SA_BQKV, _ROW_SA_BO = 0, 1
_ROW_CA_BQ, _ROW_CA_BKV, _ROW_CA_BO = 2, 3, 4
_ROW_N1W, _ROW_N1B, _ROW_N2W, _ROW_N2B, _ROW_N3W, _ROW_N3B = 5, 6, 7, 8, 9, 10
_ROW_B1, _ROW_B2 = 11, 12
_NUM_PARAM_ROWS = 13


def _bf(x):
    return x.astype(_MXU_DTYPE)


def _decoder_layer_kernel(x_ref, mem_ref,
                          sa_wqkv_ref, sa_wo_ref,
                          ca_wq_ref, ca_wkv_ref, ca_wo_ref,
                          w1_ref, w2_ref, p_ref,
                          out_ref, *, num_heads):
    """One batch element per program: x_ref (1, Lq, D), mem_ref (1, Lk, D)."""
    f32 = jnp.float32
    x = x_ref[0]                      # (Lq, D) f32
    mem = mem_ref[0]                  # (Lk, D) f32
    Lq, D = x.shape
    H = num_heads
    hd = D // H
    FF = w1_ref.shape[1]

    p = p_ref[...]                    # (13, W) f32 packed small params
    sa_bqkv = p[_ROW_SA_BQKV:_ROW_SA_BQKV + 1, :3 * D]
    sa_bo = p[_ROW_SA_BO:_ROW_SA_BO + 1, :D]
    ca_bq = p[_ROW_CA_BQ:_ROW_CA_BQ + 1, :D]
    ca_bkv = p[_ROW_CA_BKV:_ROW_CA_BKV + 1, :2 * D]
    ca_bo = p[_ROW_CA_BO:_ROW_CA_BO + 1, :D]
    n1_w, n1_b = p[_ROW_N1W:_ROW_N1W + 1, :D], p[_ROW_N1B:_ROW_N1B + 1, :D]
    n2_w, n2_b = p[_ROW_N2W:_ROW_N2W + 1, :D], p[_ROW_N2B:_ROW_N2B + 1, :D]
    n3_w, n3_b = p[_ROW_N3W:_ROW_N3W + 1, :D], p[_ROW_N3B:_ROW_N3B + 1, :D]
    b1 = p[_ROW_B1:_ROW_B1 + 1, :FF]
    b2 = p[_ROW_B2:_ROW_B2 + 1, :D]

    def layernorm(v, w, b, eps=1e-5):
        mu = jnp.mean(v, axis=-1, keepdims=True)
        c = v - mu
        var = jnp.mean(c * c, axis=-1, keepdims=True)
        return c * jax.lax.rsqrt(var + eps) * w + b

    def split_heads(t, col0):
        # static lane slices of width hd, stacked head-major -> (H, L, hd)
        return jnp.stack(
            [t[:, col0 + h * hd: col0 + (h + 1) * hd] for h in range(H)], axis=0)

    def attend(q, k, v):
        # q: (H, Lq, hd), k/v: (H, Lk, hd), all f32 (scale already folded into q).
        s = jnp.einsum('hqd,hkd->hqk', _bf(q), _bf(k),
                       preferred_element_type=f32)            # (H, Lq, Lk)
        m = jnp.max(s, axis=-1, keepdims=True)
        e = jnp.exp(s - m)
        denom = jnp.sum(e, axis=-1, keepdims=True)             # (H, Lq, 1)
        o = jnp.einsum('hqk,hkd->hqd', _bf(e), _bf(v),
                       preferred_element_type=f32)             # (H, Lq, hd)
        o = o * pl.reciprocal(denom, approx=True)
        # merge heads lane-dense -> single (D, D) output-projection matmul
        return jnp.concatenate([o[h] for h in range(H)], axis=-1)   # (Lq, D)

    # ---- self-attention (q = k = v-source = tgt); dropout1 = identity --------
    qkv = jnp.dot(_bf(x), sa_wqkv_ref[...], preferred_element_type=f32) + sa_bqkv
    sa_ctx = attend(split_heads(qkv, 0),
                    split_heads(qkv, D),
                    split_heads(qkv, 2 * D))
    sa = jnp.dot(_bf(sa_ctx), sa_wo_ref[...], preferred_element_type=f32) + sa_bo
    x = layernorm(x + sa, n1_w, n1_b)

    # ---- cross-attention (q = tgt, k = v-source = memory); dropout2 = id -----
    qc = jnp.dot(_bf(x), ca_wq_ref[...], preferred_element_type=f32) + ca_bq
    kvc = jnp.dot(_bf(mem), ca_wkv_ref[...], preferred_element_type=f32) + ca_bkv
    ca_ctx = attend(split_heads(qc, 0),
                    split_heads(kvc, 0),
                    split_heads(kvc, D))
    ca = jnp.dot(_bf(ca_ctx), ca_wo_ref[...], preferred_element_type=f32) + ca_bo
    x = layernorm(x + ca, n2_w, n2_b)

    # ---- feed-forward: linear2(relu(linear1(x))); dropout/dropout3 = id ------
    h = _bf(jnp.maximum(
        jnp.dot(_bf(x), w1_ref[...], preferred_element_type=f32) + b1, 0.0))
    ff = jnp.dot(h, w2_ref[...], preferred_element_type=f32) + b2
    out_ref[0] = layernorm(x + ff, n3_w, n3_b)


@functools.partial(jax.jit, static_argnums=(3,))
def transformer_decoder_layer(tgt, memory, params, num_heads):
    """tgt: (B, Lq, D), memory: (B, Lk, D), batch-first f32 arrays."""
    B, Lq, D = tgt.shape
    _, Lk, _ = memory.shape
    assert D % num_heads == 0
    hd = D // num_heads
    FF = params["w1"].shape[1]
    scale = 1.0 / math.sqrt(hd)

    # ---------- host-side (free, jit-folded) weight preparation --------------
    # Weights stored (in, out); scale folded into q projections; bf16 for MXU.
    sa_wqkv = jnp.concatenate(
        [params["sa_wq"] * scale, params["sa_wk"], params["sa_wv"]],
        axis=1).astype(_MXU_DTYPE)                               # (D, 3D)
    ca_wq = (params["ca_wq"] * scale).astype(_MXU_DTYPE)          # (D, D)
    ca_wkv = jnp.concatenate(
        [params["ca_wk"], params["ca_wv"]], axis=1).astype(_MXU_DTYPE)  # (D, 2D)
    sa_wo = params["sa_wo"].astype(_MXU_DTYPE)                    # (D, D)
    ca_wo = params["ca_wo"].astype(_MXU_DTYPE)                    # (D, D)
    w1 = params["w1"].astype(_MXU_DTYPE)                          # (D, FF)
    w2 = params["w2"].astype(_MXU_DTYPE)                          # (FF, D)

    # Pack all small vectors (biases + LayerNorm params) into one f32 slab.
    W = max(3 * D, FF)

    def row(v):
        v = jnp.asarray(v, jnp.float32).reshape(-1)
        return jnp.pad(v, (0, W - v.shape[0]))

    slab = jnp.stack([
        row(jnp.concatenate([params["sa_bq"] * scale,
                             params["sa_bk"], params["sa_bv"]])),
        row(params["sa_bo"]),
        row(params["ca_bq"] * scale),
        row(jnp.concatenate([params["ca_bk"], params["ca_bv"]])),
        row(params["ca_bo"]),
        row(params["n1_w"]), row(params["n1_b"]),
        row(params["n2_w"]), row(params["n2_b"]),
        row(params["n3_w"]), row(params["n3_b"]),
        row(params["b1"]), row(params["b2"]),
    ], axis=0)                                                    # (13, W) f32

    kernel = functools.partial(_decoder_layer_kernel, num_heads=num_heads)

    out = pl.pallas_call(
        kernel,
        out_shape=jax.ShapeDtypeStruct((B, Lq, D), jnp.float32),
        grid=(B,),
        in_specs=[
            pl.BlockSpec((1, Lq, D), lambda b: (b, 0, 0)),        # tgt block
            pl.BlockSpec((1, Lk, D), lambda b: (b, 0, 0)),        # memory block
            # weights: constant block index -> DMA'd once, resident across grid
            pl.BlockSpec((D, 3 * D), lambda b: (0, 0)),           # sa_wqkv bf16
            pl.BlockSpec((D, D), lambda b: (0, 0)),               # sa_wo   bf16
            pl.BlockSpec((D, D), lambda b: (0, 0)),               # ca_wq   bf16
            pl.BlockSpec((D, 2 * D), lambda b: (0, 0)),           # ca_wkv  bf16
            pl.BlockSpec((D, D), lambda b: (0, 0)),               # ca_wo   bf16
            pl.BlockSpec((D, FF), lambda b: (0, 0)),              # w1      bf16
            pl.BlockSpec((FF, D), lambda b: (0, 0)),              # w2      bf16
            pl.BlockSpec((_NUM_PARAM_ROWS, W), lambda b: (0, 0)), # bias slab f32
        ],
        out_specs=pl.BlockSpec((1, Lq, D), lambda b: (b, 0, 0)),
        compiler_params=pltpu.CompilerParams(
            dimension_semantics=("parallel",),      # v7x: 2 TCs split the batch
            vmem_limit_bytes=32 * 1024 * 1024,
        ),
    )(tgt.astype(jnp.float32), memory.astype(jnp.float32),
      sa_wqkv, sa_wo, ca_wq, ca_wkv, ca_wo, w1, w2, slab)
    return out


# -----------------------------------------------------------------------------
# pure-JAX reference mirroring TransformerDecoderLayer.forward_post (eval mode,
# masks/pos=None). `matmul_dtype` selects operand precision of every matmul
# (accumulation is always f32) so the kernel's bf16 MXU policy can be checked
# at a tight tolerance, plus a pure-f32 sanity check.
# -----------------------------------------------------------------------------
def reference(tgt, memory, params, num_heads, matmul_dtype=jnp.float32):
    B, Lq, D = tgt.shape
    hd = D // num_heads

    def mm(a, b):
        return jnp.dot(a.astype(matmul_dtype), b.astype(matmul_dtype),
                       preferred_element_type=jnp.float32)

    def ln(x, w, b, eps=1e-5):
        mu = jnp.mean(x, axis=-1, keepdims=True)
        xc = x - mu
        var = jnp.mean(xc * xc, axis=-1, keepdims=True)
        return xc * jax.lax.rsqrt(var + eps) * w + b

    def mha(xq, xkv, wq, bq, wk, bk, wv, bv, wo, bo):
        b_, lq, _ = xq.shape
        lk = xkv.shape[1]
        q = (mm(xq.reshape(-1, D), wq) + bq).reshape(b_, lq, num_heads, hd)
        k = (mm(xkv.reshape(-1, D), wk) + bk).reshape(b_, lk, num_heads, hd)
        v = (mm(xkv.reshape(-1, D), wv) + bv).reshape(b_, lk, num_heads, hd)
        q = q.transpose(0, 2, 1, 3) * (1.0 / math.sqrt(hd))
        k = k.transpose(0, 2, 1, 3)
        v = v.transpose(0, 2, 1, 3)
        s = jnp.einsum("bhqd,bhkd->bhqk", q.astype(matmul_dtype),
                       k.astype(matmul_dtype), preferred_element_type=jnp.float32)
        p = jax.nn.softmax(s, axis=-1)
        o = jnp.einsum("bhqk,bhkd->bhqd", p.astype(matmul_dtype),
                       v.astype(matmul_dtype), preferred_element_type=jnp.float32)
        o = o.transpose(0, 2, 1, 3).reshape(b_ * lq, D)
        return (mm(o, wo) + bo).reshape(b_, lq, D)

    x = tgt.astype(jnp.float32)
    sa = mha(x, x, params["sa_wq"], params["sa_bq"], params["sa_wk"],
             params["sa_bk"], params["sa_wv"], params["sa_bv"],
             params["sa_wo"], params["sa_bo"])
    x = ln(x + sa, params["n1_w"], params["n1_b"])
    ca = mha(x, memory.astype(jnp.float32), params["ca_wq"], params["ca_bq"],
             params["ca_wk"], params["ca_bk"], params["ca_wv"], params["ca_bv"],
             params["ca_wo"], params["ca_bo"])
    x = ln(x + ca, params["n2_w"], params["n2_b"])
    h = jnp.maximum(mm(x.reshape(-1, D), params["w1"]) + params["b1"], 0.0)
    ff = (mm(h, params["w2"]) + params["b2"]).reshape(B, Lq, D)
    return ln(x + ff, params["n3_w"], params["n3_b"])


if __name__ == "__main__":
    # Small shapes consistent with the module: d_model=32, nhead=4, ffn=64.
    B, LQ, LK, D, NHEAD, FF = 2, 8, 16, 32, 4, 64

    key = jax.random.PRNGKey(0)
    kit = iter(jax.random.split(key, 40))

    def rnd(shape, scale):
        return scale * jax.random.normal(next(kit), shape, jnp.float32)

    def attn_params(prefix):
        # Linear weights stored (in, out) — transposed vs. PyTorch's (out, in).
        return {
            f"{prefix}_wq": rnd((D, D), 0.08), f"{prefix}_bq": rnd((D,), 0.02),
            f"{prefix}_wk": rnd((D, D), 0.08), f"{prefix}_bk": rnd((D,), 0.02),
            f"{prefix}_wv": rnd((D, D), 0.08), f"{prefix}_bv": rnd((D,), 0.02),
            f"{prefix}_wo": rnd((D, D), 0.08), f"{prefix}_bo": rnd((D,), 0.02),
        }

    params = {}
    params.update(attn_params("sa"))
    params.update(attn_params("ca"))
    params.update({
        "n1_w": 1.0 + rnd((D,), 0.05), "n1_b": rnd((D,), 0.02),
        "n2_w": 1.0 + rnd((D,), 0.05), "n2_b": rnd((D,), 0.02),
        "n3_w": 1.0 + rnd((D,), 0.05), "n3_b": rnd((D,), 0.02),
        "w1": rnd((D, FF), 0.08), "b1": rnd((FF,), 0.02),
        "w2": rnd((FF, D), 0.08), "b2": rnd((D,), 0.02),
    })

    tgt = jax.random.normal(next(kit), (B, LQ, D), jnp.float32)
    memory = jax.random.normal(next(kit), (B, LK, D), jnp.float32)

    out = transformer_decoder_layer(tgt, memory, params, NHEAD)
    out = jax.block_until_ready(out)
    assert out.shape == (B, LQ, D)
    assert bool(jnp.all(jnp.isfinite(out)))

    # Tight check: reference with the same precision policy as the kernel
    # (bf16 MXU operands, f32 accumulation) — validates the kernel logic.
    ref_matched = reference(tgt, memory, params, NHEAD, matmul_dtype=jnp.bfloat16)
    err = float(jnp.max(jnp.abs(out - ref_matched)))
    assert err < 2e-2, f"kernel vs precision-matched reference: max|err|={err}"

    # Loose sanity check against the pure-f32 (PyTorch eval) semantics —
    # bounds the bf16-operand + approx-reciprocal deviation.
    ref_f32 = reference(tgt, memory, params, NHEAD, matmul_dtype=jnp.float32)
    err32 = float(jnp.max(jnp.abs(out - ref_f32)))
    assert err32 < 8e-2, f"kernel vs f32 reference: max|err|={err32}"

    print("KERNEL_OK")
</pallas_src>

<mosaic_0001>
module attributes {stable_mosaic.version = 11 : i64} {
  func.func @_decoder_layer_kernel(%arg0: i32, %arg1: memref<1x8x32xf32, #tpu.memory_space<vmem>>, %arg2: memref<1x16x32xf32, #tpu.memory_space<vmem>>, %arg3: memref<32x96xbf16, #tpu.memory_space<vmem>>, %arg4: memref<32x32xbf16, #tpu.memory_space<vmem>>, %arg5: memref<32x32xbf16, #tpu.memory_space<vmem>>, %arg6: memref<32x64xbf16, #tpu.memory_space<vmem>>, %arg7: memref<32x32xbf16, #tpu.memory_space<vmem>>, %arg8: memref<32x64xbf16, #tpu.memory_space<vmem>>, %arg9: memref<64x32xbf16, #tpu.memory_space<vmem>>, %arg10: memref<13x96xf32, #tpu.memory_space<vmem>>, %arg11: memref<1x8x32xf32, #tpu.memory_space<vmem>>) attributes {dimension_semantics = [#tpu.dimension_semantics<parallel>], iteration_bounds = array<i64: 2>, scalar_prefetch = 0 : i64, scratch_operands = 0 : i64, tpu.core_type = #tpu.core_type<tc>, window_params = [{transform_indices = @transform_0, window_bounds = array<i64: 1, 8, 32>}, {transform_indices = @transform_1, window_bounds = array<i64: 1, 16, 32>}, {pipeline_mode = #tpu.pipeline_mode<synchronous>, transform_indices = @transform_2, window_bounds = array<i64: 32, 96>}, {pipeline_mode = #tpu.pipeline_mode<synchronous>, transform_indices = @transform_3, window_bounds = array<i64: 32, 32>}, {pipeline_mode = #tpu.pipeline_mode<synchronous>, transform_indices = @transform_4, window_bounds = array<i64: 32, 32>}, {pipeline_mode = #tpu.pipeline_mode<synchronous>, transform_indices = @transform_5, window_bounds = array<i64: 32, 64>}, {pipeline_mode = #tpu.pipeline_mode<synchronous>, transform_indices = @transform_6, window_bounds = array<i64: 32, 32>}, {pipeline_mode = #tpu.pipeline_mode<synchronous>, transform_indices = @transform_7, window_bounds = array<i64: 32, 64>}, {pipeline_mode = #tpu.pipeline_mode<synchronous>, transform_indices = @transform_8, window_bounds = array<i64: 64, 32>}, {pipeline_mode = #tpu.pipeline_mode<synchronous>, transform_indices = @transform_9, window_bounds = array<i64: 13, 96>}, {transform_indices = @transform_10, window_bounds = array<i64: 1, 8, 32>}]} {
    %c0 = arith.constant 0 : index
    %c0_0 = arith.constant 0 : index
    %c0_1 = arith.constant 0 : index
    %0 = vector.load %arg1[%c0, %c0_0, %c0_1] : memref<1x8x32xf32, #tpu.memory_space<vmem>>, vector<1x8x32xf32>
    %1 = vector.shape_cast %0 : vector<1x8x32xf32> to vector<8x32xf32>
    %c0_2 = arith.constant 0 : index
    %c0_3 = arith.constant 0 : index
    %c0_4 = arith.constant 0 : index
    %2 = vector.load %arg2[%c0_2, %c0_3, %c0_4] : memref<1x16x32xf32, #tpu.memory_space<vmem>>, vector<1x16x32xf32>
    %3 = vector.shape_cast %2 : vector<1x16x32xf32> to vector<16x32xf32>
    %c0_5 = arith.constant 0 : index
    %c0_6 = arith.constant 0 : index
    %4 = vector.load %arg10[%c0_5, %c0_6] : memref<13x96xf32, #tpu.memory_space<vmem>>, vector<13x96xf32>
    %5 = vector.extract_strided_slice %4 {offsets = [0, 0], sizes = [1, 96], strides = [1, 1]} : vector<13x96xf32> to vector<1x96xf32>
    %6 = vector.extract_strided_slice %4 {offsets = [1, 0], sizes = [1, 32], strides = [1, 1]} : vector<13x96xf32> to vector<1x32xf32>
    %7 = vector.extract_strided_slice %4 {offsets = [2, 0], sizes = [1, 32], strides = [1, 1]} : vector<13x96xf32> to vector<1x32xf32>
    %8 = vector.extract_strided_slice %4 {offsets = [3, 0], sizes = [1, 64], strides = [1, 1]} : vector<13x96xf32> to vector<1x64xf32>
    %9 = vector.extract_strided_slice %4 {offsets = [4, 0], sizes = [1, 32], strides = [1, 1]} : vector<13x96xf32> to vector<1x32xf32>
    %10 = vector.extract_strided_slice %4 {offsets = [5, 0], sizes = [1, 32], strides = [1, 1]} : vector<13x96xf32> to vector<1x32xf32>
    %11 = vector.extract_strided_slice %4 {offsets = [6, 0], sizes = [1, 32], strides = [1, 1]} : vector<13x96xf32> to vector<1x32xf32>
    %12 = vector.extract_strided_slice %4 {offsets = [7, 0], sizes = [1, 32], strides = [1, 1]} : vector<13x96xf32> to vector<1x32xf32>
    %13 = vector.extract_strided_slice %4 {offsets = [8, 0], sizes = [1, 32], strides = [1, 1]} : vector<13x96xf32> to vector<1x32xf32>
    %14 = vector.extract_strided_slice %4 {offsets = [9, 0], sizes = [1, 32], strides = [1, 1]} : vector<13x96xf32> to vector<1x32xf32>
    %15 = vector.extract_strided_slice %4 {offsets = [10, 0], sizes = [1, 32], strides = [1, 1]} : vector<13x96xf32> to vector<1x32xf32>
    %16 = vector.extract_strided_slice %4 {offsets = [11, 0], sizes = [1, 64], strides = [1, 1]} : vector<13x96xf32> to vector<1x64xf32>
    %17 = vector.extract_strided_slice %4 {offsets = [12, 0], sizes = [1, 32], strides = [1, 1]} : vector<13x96xf32> to vector<1x32xf32>
    %18 = arith.truncf %1 : vector<8x32xf32> to vector<8x32xbf16>
    %c0_7 = arith.constant 0 : index
    %c0_8 = arith.constant 0 : index
    %19 = vector.load %arg3[%c0_7, %c0_8] : memref<32x96xbf16, #tpu.memory_space<vmem>>, vector<32x96xbf16>
    %cst = arith.constant dense<0.000000e+00> : vector<8x96xf32>
    %20 = tpu.matmul %18, %19, %cst {dimension_numbers = #tpu.dot_dimension_numbers<[1], [0], [0], [1], [0, 0, 1, 1], [], []>} : vector<8x32xbf16>, vector<32x96xbf16>, vector<8x96xf32> -> vector<8x96xf32>
    %21 = vector.broadcast %5 : vector<1x96xf32> to vector<8x96xf32>
    %22 = arith.addf %20, %21 : vector<8x96xf32>
    %23 = vector.extract_strided_slice %22 {offsets = [0, 0], sizes = [8, 8], strides = [1, 1]} : vector<8x96xf32> to vector<8x8xf32>
    %24 = vector.extract_strided_slice %22 {offsets = [0, 8], sizes = [8, 8], strides = [1, 1]} : vector<8x96xf32> to vector<8x8xf32>
    %25 = vector.extract_strided_slice %22 {offsets = [0, 16], sizes = [8, 8], strides = [1, 1]} : vector<8x96xf32> to vector<8x8xf32>
    %26 = vector.extract_strided_slice %22 {offsets = [0, 24], sizes = [8, 8], strides = [1, 1]} : vector<8x96xf32> to vector<8x8xf32>
    %27 = vector.shape_cast %23 : vector<8x8xf32> to vector<1x8x8xf32>
    %28 = vector.shape_cast %24 : vector<8x8xf32> to vector<1x8x8xf32>
    %29 = vector.shape_cast %25 : vector<8x8xf32> to vector<1x8x8xf32>
    %30 = vector.shape_cast %26 : vector<8x8xf32> to vector<1x8x8xf32>
    %31 = tpu.concatenate %27, %28, %29, %30 in 0 : vector<1x8x8xf32>, vector<1x8x8xf32>, vector<1x8x8xf32>, vector<1x8x8xf32> -> vector<4x8x8xf32>
    %32 = vector.extract_strided_slice %22 {offsets = [0, 32], sizes = [8, 8], strides = [1, 1]} : vector<8x96xf32> to vector<8x8xf32>
    %33 = vector.extract_strided_slice %22 {offsets = [0, 40], sizes = [8, 8], strides = [1, 1]} : vector<8x96xf32> to vector<8x8xf32>
    %34 = vector.extract_strided_slice %22 {offsets = [0, 48], sizes = [8, 8], strides = [1, 1]} : vector<8x96xf32> to vector<8x8xf32>
    %35 = vector.extract_strided_slice %22 {offsets = [0, 56], sizes = [8, 8], strides = [1, 1]} : vector<8x96xf32> to vector<8x8xf32>
    %36 = vector.shape_cast %32 : vector<8x8xf32> to vector<1x8x8xf32>
    %37 = vector.shape_cast %33 : vector<8x8xf32> to vector<1x8x8xf32>
    %38 = vector.shape_cast %34 : vector<8x8xf32> to vector<1x8x8xf32>
    %39 = vector.shape_cast %35 : vector<8x8xf32> to vector<1x8x8xf32>
    %40 = tpu.concatenate %36, %37, %38, %39 in 0 : vector<1x8x8xf32>, vector<1x8x8xf32>, vector<1x8x8xf32>, vector<1x8x8xf32> -> vector<4x8x8xf32>
    %41 = vector.extract_strided_slice %22 {offsets = [0, 64], sizes = [8, 8], strides = [1, 1]} : vector<8x96xf32> to vector<8x8xf32>
    %42 = vector.extract_strided_slice %22 {offsets = [0, 72], sizes = [8, 8], strides = [1, 1]} : vector<8x96xf32> to vector<8x8xf32>
    %43 = vector.extract_strided_slice %22 {offsets = [0, 80], sizes = [8, 8], strides = [1, 1]} : vector<8x96xf32> to vector<8x8xf32>
    %44 = vector.extract_strided_slice %22 {offsets = [0, 88], sizes = [8, 8], strides = [1, 1]} : vector<8x96xf32> to vector<8x8xf32>
    %45 = vector.shape_cast %41 : vector<8x8xf32> to vector<1x8x8xf32>
    %46 = vector.shape_cast %42 : vector<8x8xf32> to vector<1x8x8xf32>
    %47 = vector.shape_cast %43 : vector<8x8xf32> to vector<1x8x8xf32>
    %48 = vector.shape_cast %44 : vector<8x8xf32> to vector<1x8x8xf32>
    %49 = tpu.concatenate %45, %46, %47, %48 in 0 : vector<1x8x8xf32>, vector<1x8x8xf32>, vector<1x8x8xf32>, vector<1x8x8xf32> -> vector<4x8x8xf32>
    %50 = arith.truncf %31 : vector<4x8x8xf32> to vector<4x8x8xbf16>
    %51 = arith.truncf %40 : vector<4x8x8xf32> to vector<4x8x8xbf16>
    "tpu.trace_start"() <{level = 10 : i32, message = "hqd,hkd->hqk"}> : () -> ()
    %cst_9 = arith.constant dense<0.000000e+00> : vector<4x8x8xf32>
    %52 = tpu.matmul %50, %51, %cst_9 {dimension_numbers = #tpu.dot_dimension_numbers<[2], [2], [1], [1], [0, 0, 0, 1, 1, 1], [0], [0]>} : vector<4x8x8xbf16>, vector<4x8x8xbf16>, vector<4x8x8xf32> -> vector<4x8x8xf32>
    "tpu.trace_stop"() : () -> ()
    %cst_10 = arith.constant dense<0xFF800000> : vector<4x8xf32>
    %53 = vector.multi_reduction <maximumf>, %52, %cst_10 [2] : vector<4x8x8xf32> to vector<4x8xf32>
    %54 = vector.shape_cast %53 : vector<4x8xf32> to vector<4x8x1xf32>
    %55 = vector.broadcast %54 : vector<4x8x1xf32> to vector<4x8x8xf32>
    %56 = arith.subf %52, %55 : vector<4x8x8xf32>
    %57 = math.exp %56 : vector<4x8x8xf32>
    %cst_11 = arith.constant dense<0.000000e+00> : vector<4x8xf32>
    %58 = vector.multi_reduction <add>, %57, %cst_11 [2] : vector<4x8x8xf32> to vector<4x8xf32>
    %59 = vector.shape_cast %58 : vector<4x8xf32> to vector<4x8x1xf32>
    %60 = arith.truncf %57 : vector<4x8x8xf32> to vector<4x8x8xbf16>
    %61 = arith.truncf %49 : vector<4x8x8xf32> to vector<4x8x8xbf16>
    "tpu.trace_start"() <{level = 10 : i32, message = "hqk,hkd->hqd"}> : () -> ()
    %cst_12 = arith.constant dense<0.000000e+00> : vector<4x8x8xf32>
    %62 = tpu.matmul %60, %61, %cst_12 {dimension_numbers = #tpu.dot_dimension_numbers<[2], [1], [1], [2], [0, 0, 0, 1, 1, 2], [0], [0]>} : vector<4x8x8xbf16>, vector<4x8x8xbf16>, vector<4x8x8xf32> -> vector<4x8x8xf32>
    "tpu.trace_stop"() : () -> ()
    %63 = tpu.reciprocal %59 {approx = true} : vector<4x8x1xf32> -> vector<4x8x1xf32>
    %64 = vector.broadcast %63 : vector<4x8x1xf32> to vector<4x8x8xf32>
    %65 = arith.mulf %62, %64 : vector<4x8x8xf32>
    %66 = vector.extract_strided_slice %65 {offsets = [0, 0, 0], sizes = [1, 8, 8], strides = [1, 1, 1]} : vector<4x8x8xf32> to vector<1x8x8xf32>
    %67 = vector.shape_cast %66 : vector<1x8x8xf32> to vector<8x8xf32>
    %68 = vector.extract_strided_slice %65 {offsets = [1, 0, 0], sizes = [1, 8, 8], strides = [1, 1, 1]} : vector<4x8x8xf32> to vector<1x8x8xf32>
    %69 = vector.shape_cast %68 : vector<1x8x8xf32> to vector<8x8xf32>
    %70 = vector.extract_strided_slice %65 {offsets = [2, 0, 0], sizes = [1, 8, 8], strides = [1, 1, 1]} : vector<4x8x8xf32> to vector<1x8x8xf32>
    %71 = vector.shape_cast %70 : vector<1x8x8xf32> to vector<8x8xf32>
    %72 = vector.extract_strided_slice %65 {offsets = [3, 0, 0], sizes = [1, 8, 8], strides = [1, 1, 1]} : vector<4x8x8xf32> to vector<1x8x8xf32>
    %73 = vector.shape_cast %72 : vector<1x8x8xf32> to vector<8x8xf32>
    %74 = tpu.concatenate %67, %69, %71, %73 in 1 : vector<8x8xf32>, vector<8x8xf32>, vector<8x8xf32>, vector<8x8xf32> -> vector<8x32xf32>
    %75 = arith.truncf %74 : vector<8x32xf32> to vector<8x32xbf16>
    %c0_13 = arith.constant 0 : index
    %c0_14 = arith.constant 0 : index
    %76 = vector.load %arg4[%c0_13, %c0_14] : memref<32x32xbf16, #tpu.memory_space<vmem>>, vector<32x32xbf16>
    %cst_15 = arith.constant dense<0.000000e+00> : vector<8x32xf32>
    %77 = tpu.matmul %75, %76, %cst_15 {dimension_numbers = #tpu.dot_dimension_numbers<[1], [0], [0], [1], [0, 0, 1, 1], [], []>} : vector<8x32xbf16>, vector<32x32xbf16>, vector<8x32xf32> -> vector<8x32xf32>
    %78 = vector.broadcast %6 : vector<1x32xf32> to vector<8x32xf32>
    %79 = arith.addf %77, %78 : vector<8x32xf32>
    %80 = arith.addf %1, %79 : vector<8x32xf32>
    %cst_16 = arith.constant dense<0.000000e+00> : vector<8xf32>
    %81 = vector.multi_reduction <add>, %80, %cst_16 [1] : vector<8x32xf32> to vector<8xf32>
    %82 = vector.shape_cast %81 : vector<8xf32> to vector<8x1xf32>
    %cst_17 = arith.constant 3.200000e+01 : f32
    %83 = vector.broadcast %cst_17 : f32 to vector<8x1xf32>
    %84 = arith.divf %82, %83 : vector<8x1xf32>
    %85 = vector.broadcast %84 : vector<8x1xf32> to vector<8x32xf32>
    %86 = arith.subf %80, %85 : vector<8x32xf32>
    %87 = arith.mulf %86, %86 : vector<8x32xf32>
    %cst_18 = arith.constant dense<0.000000e+00> : vector<8xf32>
    %88 = vector.multi_reduction <add>, %87, %cst_18 [1] : vector<8x32xf32> to vector<8xf32>
    %89 = vector.shape_cast %88 : vector<8xf32> to vector<8x1xf32>
    %cst_19 = arith.constant 3.200000e+01 : f32
    %90 = vector.broadcast %cst_19 : f32 to vector<8x1xf32>
    %91 = arith.divf %89, %90 : vector<8x1xf32>
    %cst_20 = arith.constant 9.99999974E-6 : f32
    %92 = vector.broadcast %cst_20 : f32 to vector<8x1xf32>
    %93 = arith.addf %91, %92 : vector<8x1xf32>
    %94 = math.rsqrt %93 : vector<8x1xf32>
    %95 = vector.broadcast %94 : vector<8x1xf32> to vector<8x32xf32>
    %96 = arith.mulf %86, %95 : vector<8x32xf32>
    %97 = vector.broadcast %10 : vector<1x32xf32> to vector<8x32xf32>
    %98 = arith.mulf %96, %97 : vector<8x32xf32>
    %99 = vector.broadcast %11 : vector<1x32xf32> to vector<8x32xf32>
    %100 = arith.addf %98, %99 : vector<8x32xf32>
    %101 = arith.truncf %100 : vector<8x32xf32> to vector<8x32xbf16>
    %c0_21 = arith.constant 0 : index
    %c0_22 = arith.constant 0 : index
    %102 = vector.load %arg5[%c0_21, %c0_22] : memref<32x32xbf16, #tpu.memory_space<vmem>>, vector<32x32xbf16>
    %cst_23 = arith.constant dense<0.000000e+00> : vector<8x32xf32>
    %103 = tpu.matmul %101, %102, %cst_23 {dimension_numbers = #tpu.dot_dimension_numbers<[1], [0], [0], [1], [0, 0, 1, 1], [], []>} : vector<8x32xbf16>, vector<32x32xbf16>, vector<8x32xf32> -> vector<8x32xf32>
    %104 = vector.broadcast %7 : vector<1x32xf32> to vector<8x32xf32>
    %105 = arith.addf %103, %104 : vector<8x32xf32>
    %106 = arith.truncf %3 : vector<16x32xf32> to vector<16x32xbf16>
    %c0_24 = arith.constant 0 : index
    %c0_25 = arith.constant 0 : index
    %107 = vector.load %arg6[%c0_24, %c0_25] : memref<32x64xbf16, #tpu.memory_space<vmem>>, vector<32x64xbf16>
    %cst_26 = arith.constant dense<0.000000e+00> : vector<16x64xf32>
    %108 = tpu.matmul %106, %107, %cst_26 {dimension_numbers = #tpu.dot_dimension_numbers<[1], [0], [0], [1], [0, 0, 1, 1], [], []>} : vector<16x32xbf16>, vector<32x64xbf16>, vector<16x64xf32> -> vector<16x64xf32>
    %109 = vector.broadcast %8 : vector<1x64xf32> to vector<16x64xf32>
    %110 = arith.addf %108, %109 : vector<16x64xf32>
    %111 = vector.extract_strided_slice %105 {offsets = [0, 0], sizes = [8, 8], strides = [1, 1]} : vector<8x32xf32> to vector<8x8xf32>
    %112 = vector.extract_strided_slice %105 {offsets = [0, 8], sizes = [8, 8], strides = [1, 1]} : vector<8x32xf32> to vector<8x8xf32>
    %113 = vector.extract_strided_slice %105 {offsets = [0, 16], sizes = [8, 8], strides = [1, 1]} : vector<8x32xf32> to vector<8x8xf32>
    %114 = vector.extract_strided_slice %105 {offsets = [0, 24], sizes = [8, 8], strides = [1, 1]} : vector<8x32xf32> to vector<8x8xf32>
    %115 = vector.shape_cast %111 : vector<8x8xf32> to vector<1x8x8xf32>
    %116 = vector.shape_cast %112 : vector<8x8xf32> to vector<1x8x8xf32>
    %117 = vector.shape_cast %113 : vector<8x8xf32> to vector<1x8x8xf32>
    %118 = vector.shape_cast %114 : vector<8x8xf32> to vector<1x8x8xf32>
    %119 = tpu.concatenate %115, %116, %117, %118 in 0 : vector<1x8x8xf32>, vector<1x8x8xf32>, vector<1x8x8xf32>, vector<1x8x8xf32> -> vector<4x8x8xf32>
    %120 = vector.extract_strided_slice %110 {offsets = [0, 0], sizes = [16, 8], strides = [1, 1]} : vector<16x64xf32> to vector<16x8xf32>
    %121 = vector.extract_strided_slice %110 {offsets = [0, 8], sizes = [16, 8], strides = [1, 1]} : vector<16x64xf32> to vector<16x8xf32>
    %122 = vector.extract_strided_slice %110 {offsets = [0, 16], sizes = [16, 8], strides = [1, 1]} : vector<16x64xf32> to vector<16x8xf32>
    %123 = vector.extract_strided_slice %110 {offsets = [0, 24], sizes = [16, 8], strides = [1, 1]} : vector<16x64xf32> to vector<16x8xf32>
    %124 = vector.shape_cast %120 : vector<16x8xf32> to vector<1x16x8xf32>
    %125 = vector.shape_cast %121 : vector<16x8xf32> to vector<1x16x8xf32>
    %126 = vector.shape_cast %122 : vector<16x8xf32> to vector<1x16x8xf32>
    %127 = vector.shape_cast %123 : vector<16x8xf32> to vector<1x16x8xf32>
    %128 = tpu.concatenate %124, %125, %126, %127 in 0 : vector<1x16x8xf32>, vector<1x16x8xf32>, vector<1x16x8xf32>, vector<1x16x8xf32> -> vector<4x16x8xf32>
    %129 = vector.extract_strided_slice %110 {offsets = [0, 32], sizes = [16, 8], strides = [1, 1]} : vector<16x64xf32> to vector<16x8xf32>
    %130 = vector.extract_strided_slice %110 {offsets = [0, 40], sizes = [16, 8], strides = [1, 1]} : vector<16x64xf32> to vector<16x8xf32>
    %131 = vector.extract_strided_slice %110 {offsets = [0, 48], sizes = [16, 8], strides = [1, 1]} : vector<16x64xf32> to vector<16x8xf32>
    %132 = vector.extract_strided_slice %110 {offsets = [0, 56], sizes = [16, 8], strides = [1, 1]} : vector<16x64xf32> to vector<16x8xf32>
    %133 = vector.shape_cast %129 : vector<16x8xf32> to vector<1x16x8xf32>
    %134 = vector.shape_cast %130 : vector<16x8xf32> to vector<1x16x8xf32>
    %135 = vector.shape_cast %131 : vector<16x8xf32> to vector<1x16x8xf32>
    %136 = vector.shape_cast %132 : vector<16x8xf32> to vector<1x16x8xf32>
    %137 = tpu.concatenate %133, %134, %135, %136 in 0 : vector<1x16x8xf32>, vector<1x16x8xf32>, vector<1x16x8xf32>, vector<1x16x8xf32> -> vector<4x16x8xf32>
    %138 = arith.truncf %119 : vector<4x8x8xf32> to vector<4x8x8xbf16>
    %139 = arith.truncf %128 : vector<4x16x8xf32> to vector<4x16x8xbf16>
    "tpu.trace_start"() <{level = 10 : i32, message = "hqd,hkd->hqk"}> : () -> ()
    %cst_27 = arith.constant dense<0.000000e+00> : vector<4x8x16xf32>
    %140 = tpu.matmul %138, %139, %cst_27 {dimension_numbers = #tpu.dot_dimension_numbers<[2], [2], [1], [1], [0, 0, 0, 1, 1, 1], [0], [0]>} : vector<4x8x8xbf16>, vector<4x16x8xbf16>, vector<4x8x16xf32> -> vector<4x8x16xf32>
    "tpu.trace_stop"() : () -> ()
    %cst_28 = arith.constant dense<0xFF800000> : vector<4x8xf32>
    %141 = vector.multi_reduction <maximumf>, %140, %cst_28 [2] : vector<4x8x16xf32> to vector<4x8xf32>
    %142 = vector.shape_cast %141 : vector<4x8xf32> to vector<4x8x1xf32>
    %143 = vector.broadcast %142 : vector<4x8x1xf32> to vector<4x8x16xf32>
    %144 = arith.subf %140, %143 : vector<4x8x16xf32>
    %145 = math.exp %144 : vector<4x8x16xf32>
    %cst_29 = arith.constant dense<0.000000e+00> : vector<4x8xf32>
    %146 = vector.multi_reduction <add>, %145, %cst_29 [2] : vector<4x8x16xf32> to vector<4x8xf32>
    %147 = vector.shape_cast %146 : vector<4x8xf32> to vector<4x8x1xf32>
    %148 = arith.truncf %145 : vector<4x8x16xf32> to vector<4x8x16xbf16>
    %149 = arith.truncf %137 : vector<4x16x8xf32> to vector<4x16x8xbf16>
    "tpu.trace_start"() <{level = 10 : i32, message = "hqk,hkd->hqd"}> : () -> ()
    %cst_30 = arith.constant dense<0.000000e+00> : vector<4x8x8xf32>
    %150 = tpu.matmul %148, %149, %cst_30 {dimension_numbers = #tpu.dot_dimension_numbers<[2], [1], [1], [2], [0, 0, 0, 1, 1, 2], [0], [0]>} : vector<4x8x16xbf16>, vector<4x16x8xbf16>, vector<4x8x8xf32> -> vector<4x8x8xf32>
    "tpu.trace_stop"() : () -> ()
    %151 = tpu.reciprocal %147 {approx = true} : vector<4x8x1xf32> -> vector<4x8x1xf32>
    %152 = vector.broadcast %151 : vector<4x8x1xf32> to vector<4x8x8xf32>
    %153 = arith.mulf %150, %152 : vector<4x8x8xf32>
    %154 = vector.extract_strided_slice %153 {offsets = [0, 0, 0], sizes = [1, 8, 8], strides = [1, 1, 1]} : vector<4x8x8xf32> to vector<1x8x8xf32>
    %155 = vector.shape_cast %154 : vector<1x8x8xf32> to vector<8x8xf32>
    %156 = vector.extract_strided_slice %153 {offsets = [1, 0, 0], sizes = [1, 8, 8], strides = [1, 1, 1]} : vector<4x8x8xf32> to vector<1x8x8xf32>
    %157 = vector.shape_cast %156 : vector<1x8x8xf32> to vector<8x8xf32>
    %158 = vector.extract_strided_slice %153 {offsets = [2, 0, 0], sizes = [1, 8, 8], strides = [1, 1, 1]} : vector<4x8x8xf32> to vector<1x8x8xf32>
    %159 = vector.shape_cast %158 : vector<1x8x8xf32> to vector<8x8xf32>
    %160 = vector.extract_strided_slice %153 {offsets = [3, 0, 0], sizes = [1, 8, 8], strides = [1, 1, 1]} : vector<4x8x8xf32> to vector<1x8x8xf32>
    %161 = vector.shape_cast %160 : vector<1x8x8xf32> to vector<8x8xf32>
    %162 = tpu.concatenate %155, %157, %159, %161 in 1 : vector<8x8xf32>, vector<8x8xf32>, vector<8x8xf32>, vector<8x8xf32> -> vector<8x32xf32>
    %163 = arith.truncf %162 : vector<8x32xf32> to vector<8x32xbf16>
    %c0_31 = arith.constant 0 : index
    %c0_32 = arith.constant 0 : index
    %164 = vector.load %arg7[%c0_31, %c0_32] : memref<32x32xbf16, #tpu.memory_space<vmem>>, vector<32x32xbf16>
    %cst_33 = arith.constant dense<0.000000e+00> : vector<8x32xf32>
    %165 = tpu.matmul %163, %164, %cst_33 {dimension_numbers = #tpu.dot_dimension_numbers<[1], [0], [0], [1], [0, 0, 1, 1], [], []>} : vector<8x32xbf16>, vector<32x32xbf16>, vector<8x32xf32> -> vector<8x32xf32>
    %166 = vector.broadcast %9 : vector<1x32xf32> to vector<8x32xf32>
    %167 = arith.addf %165, %166 : vector<8x32xf32>
    %168 = arith.addf %100, %167 : vector<8x32xf32>
    %cst_34 = arith.constant dense<0.000000e+00> : vector<8xf32>
    %169 = vector.multi_reduction <add>, %168, %cst_34 [1] : vector<8x32xf32> to vector<8xf32>
    %170 = vector.shape_cast %169 : vector<8xf32> to vector<8x1xf32>
    %cst_35 = arith.constant 3.200000e+01 : f32
    %171 = vector.broadcast %cst_35 : f32 to vector<8x1xf32>
    %172 = arith.divf %170, %171 : vector<8x1xf32>
    %173 = vector.broadcast %172 : vector<8x1xf32> to vector<8x32xf32>
    %174 = arith.subf %168, %173 : vector<8x32xf32>
    %175 = arith.mulf %174, %174 : vector<8x32xf32>
    %cst_36 = arith.constant dense<0.000000e+00> : vector<8xf32>
    %176 = vector.multi_reduction <add>, %175, %cst_36 [1] : vector<8x32xf32> to vector<8xf32>
    %177 = vector.shape_cast %176 : vector<8xf32> to vector<8x1xf32>
    %cst_37 = arith.constant 3.200000e+01 : f32
    %178 = vector.broadcast %cst_37 : f32 to vector<8x1xf32>
    %179 = arith.divf %177, %178 : vector<8x1xf32>
    %cst_38 = arith.constant 9.99999974E-6 : f32
    %180 = vector.broadcast %cst_38 : f32 to vector<8x1xf32>
    %181 = arith.addf %179, %180 : vector<8x1xf32>
    %182 = math.rsqrt %181 : vector<8x1xf32>
    %183 = vector.broadcast %182 : vector<8x1xf32> to vector<8x32xf32>
    %184 = arith.mulf %174, %183 : vector<8x32xf32>
    %185 = vector.broadcast %12 : vector<1x32xf32> to vector<8x32xf32>
    %186 = arith.mulf %184, %185 : vector<8x32xf32>
    %187 = vector.broadcast %13 : vector<1x32xf32> to vector<8x32xf32>
    %188 = arith.addf %186, %187 : vector<8x32xf32>
    %189 = arith.truncf %188 : vector<8x32xf32> to vector<8x32xbf16>
    %c0_39 = arith.constant 0 : index
    %c0_40 = arith.constant 0 : index
    %190 = vector.load %arg8[%c0_39, %c0_40] : memref<32x64xbf16, #tpu.memory_space<vmem>>, vector<32x64xbf16>
    %cst_41 = arith.constant dense<0.000000e+00> : vector<8x64xf32>
    %191 = tpu.matmul %189, %190, %cst_41 {dimension_numbers = #tpu.dot_dimension_numbers<[1], [0], [0], [1], [0, 0, 1, 1], [], []>} : vector<8x32xbf16>, vector<32x64xbf16>, vector<8x64xf32> -> vector<8x64xf32>
    %192 = vector.broadcast %16 : vector<1x64xf32> to vector<8x64xf32>
    %193 = arith.addf %191, %192 : vector<8x64xf32>
    %cst_42 = arith.constant 0.000000e+00 : f32
    %194 = vector.broadcast %cst_42 : f32 to vector<8x64xf32>
    %195 = arith.maximumf %193, %194 : vector<8x64xf32>
    %196 = arith.truncf %195 : vector<8x64xf32> to vector<8x64xbf16>
    %c0_43 = arith.constant 0 : index
    %c0_44 = arith.constant 0 : index
    %197 = vector.load %arg9[%c0_43, %c0_44] : memref<64x32xbf16, #tpu.memory_space<vmem>>, vector<64x32xbf16>
    %cst_45 = arith.constant dense<0.000000e+00> : vector<8x32xf32>
    %198 = tpu.matmul %196, %197, %cst_45 {dimension_numbers = #tpu.dot_dimension_numbers<[1], [0], [0], [1], [0, 0, 1, 1], [], []>} : vector<8x64xbf16>, vector<64x32xbf16>, vector<8x32xf32> -> vector<8x32xf32>
    %199 = vector.broadcast %17 : vector<1x32xf32> to vector<8x32xf32>
    %200 = arith.addf %198, %199 : vector<8x32xf32>
    %201 = arith.addf %188, %200 : vector<8x32xf32>
    %cst_46 = arith.constant dense<0.000000e+00> : vector<8xf32>
    %202 = vector.multi_reduction <add>, %201, %cst_46 [1] : vector<8x32xf32> to vector<8xf32>
    %203 = vector.shape_cast %202 : vector<8xf32> to vector<8x1xf32>
    %cst_47 = arith.constant 3.200000e+01 : f32
    %204 = vector.broadcast %cst_47 : f32 to vector<8x1xf32>
    %205 = arith.divf %203, %204 : vector<8x1xf32>
    %206 = vector.broadcast %205 : vector<8x1xf32> to vector<8x32xf32>
    %207 = arith.subf %201, %206 : vector<8x32xf32>
    %208 = arith.mulf %207, %207 : vector<8x32xf32>
    %cst_48 = arith.constant dense<0.000000e+00> : vector<8xf32>
    %209 = vector.multi_reduction <add>, %208, %cst_48 [1] : vector<8x32xf32> to vector<8xf32>
    %210 = vector.shape_cast %209 : vector<8xf32> to vector<8x1xf32>
    %cst_49 = arith.constant 3.200000e+01 : f32
    %211 = vector.broadcast %cst_49 : f32 to vector<8x1xf32>
    %212 = arith.divf %210, %211 : vector<8x1xf32>
    %cst_50 = arith.constant 9.99999974E-6 : f32
    %213 = vector.broadcast %cst_50 : f32 to vector<8x1xf32>
    %214 = arith.addf %212, %213 : vector<8x1xf32>
    %215 = math.rsqrt %214 : vector<8x1xf32>
    %216 = vector.broadcast %215 : vector<8x1xf32> to vector<8x32xf32>
    %217 = arith.mulf %207, %216 : vector<8x32xf32>
    %218 = vector.broadcast %14 : vector<1x32xf32> to vector<8x32xf32>
    %219 = arith.mulf %217, %218 : vector<8x32xf32>
    %220 = vector.broadcast %15 : vector<1x32xf32> to vector<8x32xf32>
    %221 = arith.addf %219, %220 : vector<8x32xf32>
    %c0_51 = arith.constant 0 : index
    %c0_52 = arith.constant 0 : index
    %c0_53 = arith.constant 0 : index
    %222 = vector.load %arg11[%c0_51, %c0_52, %c0_53] : memref<1x8x32xf32, #tpu.memory_space<vmem>>, vector<1x8x32xf32>
    %223 = vector.shape_cast %222 : vector<1x8x32xf32> to vector<8x32xf32>
    %224 = vector.shape_cast %221 : vector<8x32xf32> to vector<1x8x32xf32>
    tpu.vector_store %arg11[%c0_51, %c0_52, %c0_53], %224 {strides = array<i32>} : memref<1x8x32xf32, #tpu.memory_space<vmem>>, vector<1x8x32xf32>,
    return
  }
  func.func @transform_0(%arg0: i32) -> (i32, i32, i32) {
    %c0_i32 = arith.constant 0 : i32
    %c0_i32_0 = arith.constant 0 : i32
    %c0_i32_1 = arith.constant 0 : i32
    return %arg0, %c0_i32, %c0_i32_0 : i32, i32, i32
  }
  func.func @transform_1(%arg0: i32) -> (i32, i32, i32) {
    %c0_i32 = arith.constant 0 : i32
    %c0_i32_0 = arith.constant 0 : i32
    %c0_i32_1 = arith.constant 0 : i32
    return %arg0, %c0_i32, %c0_i32_0 : i32, i32, i32
  }
  func.func @transform_2(%arg0: i32) -> (i32, i32) {
    %c0_i32 = arith.constant 0 : i32
    %c0_i32_0 = arith.constant 0 : i32
    %c0_i32_1 = arith.constant 0 : i32
    return %c0_i32, %c0_i32_0 : i32, i32
  }
  func.func @transform_3(%arg0: i32) -> (i32, i32) {
    %c0_i32 = arith.constant 0 : i32
    %c0_i32_0 = arith.constant 0 : i32
    %c0_i32_1 = arith.constant 0 : i32
    return %c0_i32, %c0_i32_0 : i32, i32
  }
  func.func @transform_4(%arg0: i32) -> (i32, i32) {
    %c0_i32 = arith.constant 0 : i32
    %c0_i32_0 = arith.constant 0 : i32
    %c0_i32_1 = arith.constant 0 : i32
    return %c0_i32, %c0_i32_0 : i32, i32
  }
  func.func @transform_5(%arg0: i32) -> (i32, i32) {
    %c0_i32 = arith.constant 0 : i32
    %c0_i32_0 = arith.constant 0 : i32
    %c0_i32_1 = arith.constant 0 : i32
    return %c0_i32, %c0_i32_0 : i32, i32
  }
  func.func @transform_6(%arg0: i32) -> (i32, i32) {
    %c0_i32 = arith.constant 0 : i32
    %c0_i32_0 = arith.constant 0 : i32
    %c0_i32_1 = arith.constant 0 : i32
    return %c0_i32, %c0_i32_0 : i32, i32
  }
  func.func @transform_7(%arg0: i32) -> (i32, i32) {
    %c0_i32 = arith.constant 0 : i32
    %c0_i32_0 = arith.constant 0 : i32
    %c0_i32_1 = arith.constant 0 : i32
    return %c0_i32, %c0_i32_0 : i32, i32
  }
  func.func @transform_8(%arg0: i32) -> (i32, i32) {
    %c0_i32 = arith.constant 0 : i32
    %c0_i32_0 = arith.constant 0 : i32
    %c0_i32_1 = arith.constant 0 : i32
    return %c0_i32, %c0_i32_0 : i32, i32
  }
  func.func @transform_9(%arg0: i32) -> (i32, i32) {
    %c0_i32 = arith.constant 0 : i32
    %c0_i32_0 = arith.constant 0 : i32
    %c0_i32_1 = arith.constant 0 : i32
    return %c0_i32, %c0_i32_0 : i32, i32
  }
  func.func @transform_10(%arg0: i32) -> (i32, i32, i32) {
    %c0_i32 = arith.constant 0 : i32
    %c0_i32_0 = arith.constant 0 : i32
    %c0_i32_1 = arith.constant 0 : i32
    return %arg0, %c0_i32, %c0_i32_0 : i32, i32, i32
  }
}

</mosaic_0001>

<llo_original>
// kernel: transformer_decoder_layer.1
$region0: #{transformer_decoder_layer.1}
  #allocation0 [shape = 'u32[]', space=smem, size = 0x4, offset = 0x4, fixed_abs, tag = 'smem constant byte address 0x4 - core index']
  #allocation1 [shape = 'u32[144,128]{1,0:T(1,128)}', space=vmem, size = 0x12000, scoped, tag = 'internal scratch']
  %s0 = inlined_call_operand.vmem [shape: f32[2,8,32], index: 0, kind: input, shape index: {}]
  %s1 = inlined_call_operand.vmem [shape: f32[2,16,32], index: 1, kind: input, shape index: {}]
  %s2 = inlined_call_operand.vmem [shape: bf16[32,96], index: 2, kind: input, shape index: {}]
  %s3 = inlined_call_operand.vmem [shape: bf16[32,32], index: 3, kind: input, shape index: {}]
  %s4 = inlined_call_operand.vmem [shape: bf16[32,32], index: 4, kind: input, shape index: {}]
  %s5 = inlined_call_operand.vmem [shape: bf16[32,64], index: 5, kind: input, shape index: {}]
  %s6 = inlined_call_operand.vmem [shape: bf16[32,32], index: 6, kind: input, shape index: {}]
  %s7 = inlined_call_operand.vmem [shape: bf16[32,64], index: 7, kind: input, shape index: {}]
  %s8 = inlined_call_operand.vmem [shape: bf16[64,32], index: 8, kind: input, shape index: {}]
  %s9 = inlined_call_operand.vmem [shape: f32[13,96], index: 9, kind: input, shape index: {}]
  %s10 = inlined_call_operand.hbm [shape: f32[2,8,32], index: 10, kind: output, shape index: {}]
  %s11 = sld [smem:[#allocation0]]
  $region73: #{transformer_decoder_layer.1} parent=0
    _
  %s13 = ssub.s32 1, %s11
  %s14 = scalar_select 0, %s13, %s11
  $region1: #{transformer_decoder_layer.1} parent=0
    #allocation2 [shape = 'u8[8192]{0}', space=vmem, size = 0x2000, scoped, tag = 'output window, operand 0']
    #allocation3 [shape = 's32[2]{0}', space=sflag, size = 0x8, scoped, tag = 'scoped memory for transformer_decoder_layer.1']
    %15 = vsyncpa [#allocation3], 0
    %s16 = scalar_lea.sflag [#allocation3], 1
    %17 = vsyncpa %s16, 0
    loop: start=0, step=1, limit=4
    $region2: #{transformer_decoder_layer.1} parent=1 // loop_pre_header
      _
    $region3: #{transformer_decoder_layer.1} parent=1 // loop_header
      %s19 = sphi 0, %s23
      %p20 = scmp.ge.s32.totalorder %s19, 4
      %s29 = sphi 0, %s31
      %s32 = sphi 0, %s29
      %s33 = sphi 0, %s32
      %s49 = sphi 0, %s33
      %s55 = sphi 0, %s57
      %s58 = sphi 0, %s55
      %s59 = sphi 0, %s58
      %s75 = sphi 0, %s59
      %s79 = sphi 0, %s79
      %s81 = sphi 0, %s79
      %s82 = sphi 0, %s81
      %s96 = sphi 0, %s82
      %s100 = sphi 0, %s100
      %s102 = sphi 0, %s100
      %s103 = sphi 0, %s102
      %s117 = sphi 0, %s103
      %s121 = sphi 0, %s121
      %s123 = sphi 0, %s121
      %s124 = sphi 0, %s123
      %s138 = sphi 0, %s124
      %s142 = sphi 0, %s142
      %s144 = sphi 0, %s142
      %s145 = sphi 0, %s144
      %s159 = sphi 0, %s145
      %s163 = sphi 0, %s163
      %s165 = sphi 0, %s163
      %s166 = sphi 0, %s165
      %s180 = sphi 0, %s166
      %s184 = sphi 0, %s184
      %s186 = sphi 0, %s184
      %s187 = sphi 0, %s186
      %s201 = sphi 0, %s187
      %s205 = sphi 0, %s205
      %s207 = sphi 0, %s205
      %s208 = sphi 0, %s207
      %s222 = sphi 0, %s208
      %s226 = sphi 0, %s226
      %s228 = sphi 0, %s226
      %s229 = sphi 0, %s228
      %s243 = sphi 0, %s229
      %s249 = sphi 0, %s251
      %s252 = sphi 0, %s249
      %s253 = sphi 0, %s252
      %s269 = sphi 0, %s253
    $region4: #{transformer_decoder_layer.1} parent=1 // loop_header_branch
      %22 = sbr.rel (%p20) target = $region8
    $region5: #{transformer_decoder_layer.1} parent=1 // loop_body
      %s24 = ssub.s32 %s19, 1
      %s25 = ssub.s32 %s19, 2
      %s26 = sadd.s32 %s19, 1
      %s27 = ssub.s32 %s19, %s26
      %p28 = scmp.eq.s32.totalorder %s27, 0
      %s30 = sadd.s32 %s29, 1
      %s31 = scalar_select %p28, %s29, %s30
      %p34 = pneg %p28
      %p35 = scmp.eq.s32.totalorder %s19, 1
      %p36 = por %p34, %p35
      %p37 = scmp.ne.s32.totalorder %s29, %s32
      %p38 = scmp.eq.s32.totalorder %s19, 0
      %p39 = por %p37, %p38
      %p40 = scmp.ne.s32.totalorder %s29, %s32
      %p41 = scmp.eq.s32.totalorder %s24, 1
      %p42 = por %p40, %p41
      %p43 = scmp.ne.s32.totalorder %s32, %s33
      %p44 = scmp.eq.s32.totalorder %s24, 0
      %p45 = por %p43, %p44
      %p46 = scmp.ne.s32.totalorder %s32, %s33
      %p47 = scmp.eq.s32.totalorder %s25, 1
      %p48 = por %p46, %p47
      %p50 = scmp.ne.s32.totalorder %s33, %s49
      %p51 = scmp.eq.s32.totalorder %s25, 0
      %p52 = por %p50, %p51
      %s53 = ssub.s32 %s19, %s26
      %p54 = scmp.eq.s32.totalorder %s53, 0
      %s56 = sadd.s32 %s55, 1
      %s57 = scalar_select %p54, %s55, %s56
      %p60 = pneg %p54
      %p61 = scmp.eq.s32.totalorder %s19, 1
      %p62 = por %p60, %p61
      %p63 = scmp.ne.s32.totalorder %s55, %s58
      %p64 = scmp.eq.s32.totalorder %s19, 0
      %p65 = por %p63, %p64
      %p66 = scmp.ne.s32.totalorder %s55, %s58
      %p67 = scmp.eq.s32.totalorder %s24, 1
      %p68 = por %p66, %p67
      %p69 = scmp.ne.s32.totalorder %s58, %s59
      %p70 = scmp.eq.s32.totalorder %s24, 0
      %p71 = por %p69, %p70
      %p72 = scmp.ne.s32.totalorder %s58, %s59
      %p73 = scmp.eq.s32.totalorder %s25, 1
      %p74 = por %p72, %p73
      %p76 = scmp.ne.s32.totalorder %s59, %s75
      %p77 = scmp.eq.s32.totalorder %s25, 0
      %p78 = por %p76, %p77
      %s80 = sadd.s32 %s79, 1
      %p83 = scmp.eq.s32.totalorder %s19, 1
      %p84 = scmp.ne.s32.totalorder %s79, %s81
      %p85 = scmp.eq.s32.totalorder %s19, 0
      %p86 = por %p84, %p85
      %p87 = scmp.ne.s32.totalorder %s79, %s81
      %p88 = scmp.eq.s32.totalorder %s24, 1
      %p89 = por %p87, %p88
      %p90 = scmp.ne.s32.totalorder %s81, %s82
      %p91 = scmp.eq.s32.totalorder %s24, 0
      %p92 = por %p90, %p91
      %p93 = scmp.ne.s32.totalorder %s81, %s82
      %p94 = scmp.eq.s32.totalorder %s25, 1
      %p95 = por %p93, %p94
      %p97 = scmp.ne.s32.totalorder %s82, %s96
      %p98 = scmp.eq.s32.totalorder %s25, 0
      %p99 = por %p97, %p98
      %s101 = sadd.s32 %s100, 1
      %p104 = scmp.eq.s32.totalorder %s19, 1
      %p105 = scmp.ne.s32.totalorder %s100, %s102
      %p106 = scmp.eq.s32.totalorder %s19, 0
      %p107 = por %p105, %p106
      %p108 = scmp.ne.s32.totalorder %s100, %s102
      %p109 = scmp.eq.s32.totalorder %s24, 1
      %p110 = por %p108, %p109
      %p111 = scmp.ne.s32.totalorder %s102, %s103
      %p112 = scmp.eq.s32.totalorder %s24, 0
      %p113 = por %p111, %p112
      %p114 = scmp.ne.s32.totalorder %s102, %s103
      %p115 = scmp.eq.s32.totalorder %s25, 1
      %p116 = por %p114, %p115
      %p118 = scmp.ne.s32.totalorder %s103, %s117
      %p119 = scmp.eq.s32.totalorder %s25, 0
      %p120 = por %p118, %p119
      %s122 = sadd.s32 %s121, 1
      %p125 = scmp.eq.s32.totalorder %s19, 1
      %p126 = scmp.ne.s32.totalorder %s121, %s123
      %p127 = scmp.eq.s32.totalorder %s19, 0
      %p128 = por %p126, %p127
      %p129 = scmp.ne.s32.totalorder %s121, %s123
      %p130 = scmp.eq.s32.totalorder %s24, 1
      %p131 = por %p129, %p130
      %p132 = scmp.ne.s32.totalorder %s123, %s124
      %p133 = scmp.eq.s32.totalorder %s24, 0
      %p134 = por %p132, %p133
      %p135 = scmp.ne.s32.totalorder %s123, %s124
      %p136 = scmp.eq.s32.totalorder %s25, 1
      %p137 = por %p135, %p136
      %p139 = scmp.ne.s32.totalorder %s124, %s138
      %p140 = scmp.eq.s32.totalorder %s25, 0
      %p141 = por %p139, %p140
      %s143 = sadd.s32 %s142, 1
      %p146 = scmp.eq.s32.totalorder %s19, 1
      %p147 = scmp.ne.s32.totalorder %s142, %s144
      %p148 = scmp.eq.s32.totalorder %s19, 0
      %p149 = por %p147, %p148
      %p150 = scmp.ne.s32.totalorder %s142, %s144
      %p151 = scmp.eq.s32.totalorder %s24, 1
      %p152 = por %p150, %p151
      %p153 = scmp.ne.s32.totalorder %s144, %s145
      %p154 = scmp.eq.s32.totalorder %s24, 0
      %p155 = por %p153, %p154
      %p156 = scmp.ne.s32.totalorder %s144, %s145
      %p157 = scmp.eq.s32.totalorder %s25, 1
      %p158 = por %p156, %p157
      %p160 = scmp.ne.s32.totalorder %s145, %s159
      %p161 = scmp.eq.s32.totalorder %s25, 0
      %p162 = por %p160, %p161
      %s164 = sadd.s32 %s163, 1
      %p167 = scmp.eq.s32.totalorder %s19, 1
      %p168 = scmp.ne.s32.totalorder %s163, %s165
      %p169 = scmp.eq.s32.totalorder %s19, 0
      %p170 = por %p168, %p169
      %p171 = scmp.ne.s32.totalorder %s163, %s165
      %p172 = scmp.eq.s32.totalorder %s24, 1
      %p173 = por %p171, %p172
      %p174 = scmp.ne.s32.totalorder %s165, %s166
      %p175 = scmp.eq.s32.totalorder %s24, 0
      %p176 = por %p174, %p175
      %p177 = scmp.ne.s32.totalorder %s165, %s166
      %p178 = scmp.eq.s32.totalorder %s25, 1
      %p179 = por %p177, %p178
      %p181 = scmp.ne.s32.totalorder %s166, %s180
      %p182 = scmp.eq.s32.totalorder %s25, 0
      %p183 = por %p181, %p182
      %s185 = sadd.s32 %s184, 1
      %p188 = scmp.eq.s32.totalorder %s19, 1
      %p189 = scmp.ne.s32.totalorder %s184, %s186
      %p190 = scmp.eq.s32.totalorder %s19, 0
      %p191 = por %p189, %p190
      %p192 = scmp.ne.s32.totalorder %s184, %s186
      %p193 = scmp.eq.s32.totalorder %s24, 1
      %p194 = por %p192, %p193
      %p195 = scmp.ne.s32.totalorder %s186, %s187
      %p196 = scmp.eq.s32.totalorder %s24, 0
      %p197 = por %p195, %p196
      %p198 = scmp.ne.s32.totalorder %s186, %s187
      %p199 = scmp.eq.s32.totalorder %s25, 1
      %p200 = por %p198, %p199
      %p202 = scmp.ne.s32.totalorder %s187, %s201
      %p203 = scmp.eq.s32.totalorder %s25, 0
      %p204 = por %p202, %p203
      %s206 = sadd.s32 %s205, 1
      %p209 = scmp.eq.s32.totalorder %s19, 1
      %p210 = scmp.ne.s32.totalorder %s205, %s207
      %p211 = scmp.eq.s32.totalorder %s19, 0
      %p212 = por %p210, %p211
      %p213 = scmp.ne.s32.totalorder %s205, %s207
      %p214 = scmp.eq.s32.totalorder %s24, 1
      %p215 = por %p213, %p214
      %p216 = scmp.ne.s32.totalorder %s207, %s208
      %p217 = scmp.eq.s32.totalorder %s24, 0
      %p218 = por %p216, %p217
      %p219 = scmp.ne.s32.totalorder %s207, %s208
      %p220 = scmp.eq.s32.totalorder %s25, 1
      %p221 = por %p219, %p220
      %p223 = scmp.ne.s32.totalorder %s208, %s222
      %p224 = scmp.eq.s32.totalorder %s25, 0
      %p225 = por %p223, %p224
      %s227 = sadd.s32 %s226, 1
      %p230 = scmp.eq.s32.totalorder %s19, 1
      %p231 = scmp.ne.s32.totalorder %s226, %s228
      %p232 = scmp.eq.s32.totalorder %s19, 0
      %p233 = por %p231, %p232
      %p234 = scmp.ne.s32.totalorder %s226, %s228
      %p235 = scmp.eq.s32.totalorder %s24, 1
      %p236 = por %p234, %p235
      %p237 = scmp.ne.s32.totalorder %s228, %s229
      %p238 = scmp.eq.s32.totalorder %s24, 0
      %p239 = por %p237, %p238
      %p240 = scmp.ne.s32.totalorder %s228, %s229
      %p241 = scmp.eq.s32.totalorder %s25, 1
      %p242 = por %p240, %p241
      %p244 = scmp.ne.s32.totalorder %s229, %s243
      %p245 = scmp.eq.s32.totalorder %s25, 0
      %p246 = por %p244, %p245
      %s247 = ssub.s32 %s19, %s26
      %p248 = scmp.eq.s32.totalorder %s247, 0
      %s250 = sadd.s32 %s249, 1
      %s251 = scalar_select %p248, %s249, %s250
      %p254 = pneg %p248
      %p255 = scmp.eq.s32.totalorder %s19, 1
      %p256 = por %p254, %p255
      %p257 = scmp.ne.s32.totalorder %s249, %s252
      %p258 = scmp.eq.s32.totalorder %s19, 0
      %p259 = por %p257, %p258
      %p260 = scmp.ne.s32.totalorder %s249, %s252
      %p261 = scmp.eq.s32.totalorder %s24, 1
      %p262 = por %p260, %p261
      %p263 = scmp.ne.s32.totalorder %s252, %s253
      %p264 = scmp.eq.s32.totalorder %s24, 0
      %p265 = por %p263, %p264
      %p266 = scmp.ne.s32.totalorder %s252, %s253
      %p267 = scmp.eq.s32.totalorder %s25, 1
      %p268 = por %p266, %p267
      %p270 = scmp.ne.s32.totalorder %s253, %s269
      %p271 = scmp.eq.s32.totalorder %s25, 0
      %p272 = por %p270, %p271
      %p273 = scmp.le.s32.totalorder 1, %s19
      %p274 = scmp.lt.s32.totalorder %s19, 3
      %p275 = pnand %p273, %p274
      %p276 = pneg %p275
      // Predicated region
      $region9: #{transformer_decoder_layer.1} parent=5 // pred_check
        _
      $region10: #{transformer_decoder_layer.1} parent=5 // pred_check_branch
        %278 = sbr.rel (%p275) target = $region12
      $region11: #{transformer_decoder_layer.1} parent=5 // pred_region
        %s279 = ssub.s32 %s19, 1
        // Predicated region
        $region13: #{transformer_decoder_layer.1} parent=11 // pred_check
          %p280 = pneg %p92
        $region14: #{transformer_decoder_layer.1} parent=11 // pred_check_branch
          %282 = sbr.rel (%p280) target = $region16
        $region15: #{transformer_decoder_layer.1} parent=11 // pred_region
          _
        $region16: #{transformer_decoder_layer.1} parent=11 // pred_fallthru
          _
        // Predicated region
        $region17: #{transformer_decoder_layer.1} parent=11 // pred_check
          %p283 = pneg %p113
        $region18: #{transformer_decoder_layer.1} parent=11 // pred_check_branch
          %285 = sbr.rel (%p283) target = $region20
        $region19: #{transformer_decoder_layer.1} parent=11 // pred_region
          _
        $region20: #{transformer_decoder_layer.1} parent=11 // pred_fallthru
          _
        // Predicated region
        $region21: #{transformer_decoder_layer.1} parent=11 // pred_check
          %p286 = pneg %p134
        $region22: #{transformer_decoder_layer.1} parent=11 // pred_check_branch
          %288 = sbr.rel (%p286) target = $region24
        $region23: #{transformer_decoder_layer.1} parent=11 // pred_region
          _
        $region24: #{transformer_decoder_layer.1} parent=11 // pred_fallthru
          _
        // Predicated region
        $region25: #{transformer_decoder_layer.1} parent=11 // pred_check
          %p289 = pneg %p155
        $region26: #{transformer_decoder_layer.1} parent=11 // pred_check_branch
          %291 = sbr.rel (%p289) target = $region28
        $region27: #{transformer_decoder_layer.1} parent=11 // pred_region
          _
        $region28: #{transformer_decoder_layer.1} parent=11 // pred_fallthru
          _
        // Predicated region
        $region29: #{transformer_decoder_layer.1} parent=11 // pred_check
          %p292 = pneg %p176
        $region30: #{transformer_decoder_layer.1} parent=11 // pred_check_branch
          %294 = sbr.rel (%p292) target = $region32
        $region31: #{transformer_decoder_layer.1} parent=11 // pred_region
          _
        $region32: #{transformer_decoder_layer.1} parent=11 // pred_fallthru
          _
        // Predicated region
        $region33: #{transformer_decoder_layer.1} parent=11 // pred_check
          %p295 = pneg %p197
        $region34: #{transformer_decoder_layer.1} parent=11 // pred_check_branch
          %297 = sbr.rel (%p295) target = $region36
        $region35: #{transformer_decoder_layer.1} parent=11 // pred_region
          _
        $region36: #{transformer_decoder_layer.1} parent=11 // pred_fallthru
          _
        // Predicated region
        $region37: #{transformer_decoder_layer.1} parent=11 // pred_check
          %p298 = pneg %p218
        $region38: #{transformer_decoder_layer.1} parent=11 // pred_check_branch
          %300 = sbr.rel (%p298) target = $region40
        $region39: #{transformer_decoder_layer.1} parent=11 // pred_region
          _
        $region40: #{transformer_decoder_layer.1} parent=11 // pred_fallthru
          _
        // Predicated region
        $region41: #{transformer_decoder_layer.1} parent=11 // pred_check
          %p301 = pneg %p239
        $region42: #{transformer_decoder_layer.1} parent=11 // pred_check_branch
          %303 = sbr.rel (%p301) target = $region44
        $region43: #{transformer_decoder_layer.1} parent=11 // pred_region
          _
        $region44: #{transformer_decoder_layer.1} parent=11 // pred_fallthru
          _
      $region12: #{transformer_decoder_layer.1} parent=5 // pred_fallthru
        _
      %p304 = scmp.lt.s32.totalorder %s19, 2
      // Predicated region
      $region45: #{transformer_decoder_layer.1} parent=5 // pred_check
        %p305 = pneg %p304
      $region46: #{transformer_decoder_layer.1} parent=5 // pred_check_branch
        %307 = sbr.rel (%p305) target = $region48
      $region47: #{transformer_decoder_layer.1} parent=5 // pred_region
        // Predicated region
        $region49: #{transformer_decoder_layer.1} parent=47 // pred_check
          %p308 = pneg %p39
        $region50: #{transformer_decoder_layer.1} parent=47 // pred_check_branch
          %310 = sbr.rel (%p308) target = $region52
        $region51: #{transformer_decoder_layer.1} parent=47 // pred_region
          %p311 = scmp.lt.s32.totalorder %s19, 1
          %s312 = scalar_select %p311, %s19, 1
          %s313 = smul.addr %s312, 8
          %s314 = scalar_lea.vmem %s0, %s313
        $region52: #{transformer_decoder_layer.1} parent=47 // pred_fallthru
          _
        // Predicated region
        $region53: #{transformer_decoder_layer.1} parent=47 // pred_check
          %p315 = pneg %p65
        $region54: #{transformer_decoder_layer.1} parent=47 // pred_check_branch
          %317 = sbr.rel (%p315) target = $region56
        $region55: #{transformer_decoder_layer.1} parent=47 // pred_region
          %p318 = scmp.lt.s32.totalorder %s19, 1
          %s319 = scalar_select %p318, %s19, 1
          %s320 = smul.addr %s319, 2
          %s321 = smul.addr %s320, 8
          %s322 = scalar_lea.vmem %s1, %s321
        $region56: #{transformer_decoder_layer.1} parent=47 // pred_fallthru
          _
      $region48: #{transformer_decoder_layer.1} parent=5 // pred_fallthru
        _
      %p323 = scmp.le.s32.totalorder 1, %s19
      %p324 = scmp.lt.s32.totalorder %s19, 3
      %p325 = pnand %p323, %p324
      %p326 = pneg %p325
      // Predicated region
      $region57: #{transformer_decoder_layer.1} parent=5 // pred_check
        _
      $region58: #{transformer_decoder_layer.1} parent=5 // pred_check_branch
        %328 = sbr.rel (%p325) target = $region60
      $region59: #{transformer_decoder_layer.1} parent=5 // pred_region
        %s329 = ssub.s32 %s19, 1
        %p330 = scmp.lt.s32.totalorder %s24, 1
        %s331 = scalar_select %p330, %s24, 1
        %s332 = smul.addr %s331, 8
        %s333 = scalar_lea.vmem %s0, %s332
        %p334 = pneg %p45
        %p335 = pneg %p42
        %p336 = scmp.lt.s32.totalorder %s24, 1
        %s337 = scalar_select %p336, %s24, 1
        %s338 = smul.addr %s337, 2
        %s339 = smul.addr %s338, 8
        %s340 = scalar_lea.vmem %s1, %s339
        %p341 = pneg %p71
        %p342 = pneg %p68
        %p343 = pneg %p92
        %p344 = pneg %p89
        %p345 = pneg %p113
        %p346 = pneg %p110
        %p347 = pneg %p134
        %p348 = pneg %p131
        %p349 = pneg %p155
        %p350 = pneg %p152
        %p351 = pneg %p176
        %p352 = pneg %p173
        %p353 = pneg %p197
        %p354 = pneg %p194
        %p355 = pneg %p218
        %p356 = pneg %p215
        %p357 = pneg %p239
        %p358 = pneg %p236
        %p359 = pneg %p265
        %p360 = pneg %p262
        %s361 = sand.u32 %s252, 1
        %s362 = scalar_lea.sflag [#allocation3], %s361
        %s363 = sand.u32 %s252, 1
        %s364 = smul.addr %s363, 8
        %s365 = scalar_lea.vmem [#allocation2], %s364
        %p366 = scmp.lt.s32.totalorder %s24, 1
        %s367 = scalar_select %p366, %s24, 1
        %s368 = smul.addr %s367, 8
        %s369 = scalar_lea.vmem %s0, %s368
        %p370 = scmp.lt.s32.totalorder %s24, 1
        %s371 = scalar_select %p370, %s24, 1
        %s372 = smul.addr %s371, 2
        %s373 = smul.addr %s372, 8
        %s374 = scalar_lea.vmem %s1, %s373
        %v376 = vld [vmem:[%s369] sm:$0xff]
        %v377 = vld [vmem:[%s374] sm:$0xff]
        %v378 = vld [vmem:[%s374 + $0x8] sm:$0xff]
        %v379 = vld [vmem:[%s9] sm:$0xff]
        %v380 = vld [vmem:[%s9 + $0x8] sm:$0x1f]
        %v381 = vpack.c.bf16 %v376, %v376
        %v382 = vld [vmem:[%s2] sm:$0xf]
        %v383 = vld [vmem:[%s2 + $0x4] sm:$0xf]
        %v384 = vld [vmem:[%s2 + $0x8] sm:$0xf]
        %v385 = vld [vmem:[%s2 + $0xc] sm:$0xf]
        %v386 = vlaneseq
        %v387 = vshrl.u32 %v386, 7
        %v388 = vsub.s32 0, %v387
        %v389 = vrot.slane %v379, %v388
        %v394 = vunpack.c.l.b16 %v382
        %v395 = vunpack.c.l.b16 %v383
        %v396 = vunpack.c.l.b16 %v384
        %v397 = vunpack.c.l.b16 %v385
        %v398 = vpack.c.b16 %v395, %v394
        %v399 = vpack.c.b16 %v397, %v396
        %vm402 = vcmask 261120
        %v404 = vsel %vm402, %v381, 0
        %406 = vmatprep.subr.bf16.mxu0 0
        %407 = vmatpush1.bf16.msra.mxu0 0
        %408 = vmatprep.subr.bf16.mxu0 0
        %409 = vmatpush1.bf16.msra.mxu0 0
        %410 = vmatprep.subr.bf16.mxu0 0
        %411 = vmatpush1.bf16.msra.mxu0 0
        %412 = vmatprep.subr.bf16.mxu0 0
        %413 = vmatpush1.bf16.msra.mxu0 0
        %414 = vmatprep.subr.bf16.mxu0 0
        %415 = vmatpush1.bf16.msra.mxu0 0
        %416 = vmatprep.subr.bf16.mxu0 0
        %417 = vmatpush1.bf16.msra.mxu0 0
        %418 = vmatprep.subr.bf16.mxu0 0
        %419 = vmatpush1.bf16.msra.mxu0 %v399
        %420 = vmatprep.subr.bf16.mxu0 0
        %421 = vmatpush1.bf16.msra.mxu0 %v398
        %422 = vmatprep.subr.bf16.mxu0 0
        %423 = vmatpush2.bf16.msra.mxu0 0
        %424 = vmatprep.subr.bf16.mxu0 0
        %425 = vmatpush2.bf16.msra.mxu0 0
        %426 = vmatprep.subr.bf16.mxu0 0
        %427 = vmatpush2.bf16.msra.mxu0 0
        %428 = vmatprep.subr.bf16.mxu0 0
        %429 = vmatpush2.bf16.msra.mxu0 0
        %430 = vmatprep.subr.bf16.mxu0 0
        %431 = vmatpush2.bf16.msra.mxu0 0
        %432 = vmatprep.subr.bf16.mxu0 0
        %433 = vmatpush2.bf16.msra.mxu0 0
        %434 = vmatprep.subr.bf16.mxu0 0
        %435 = vmatpush2.bf16.msra.mxu0 0
        %436 = vmatprep.subr.bf16.mxu0 0
        %437 = vmatpush2.bf16.msra.mxu0 0
        %438 = vmatprep.mubr.bf16.mxu0 0
        %439 = vmatmul.mubr.bf16.gmra.mxu0 %v404
        %v440 = vpop.f32.mrf.mxu0
        %v441 = vadd.f32 %v389, %v440
        %v442 = vpop.f32.mrf.mxu0
        %v443 = vpop.f32.mrf.mxu0
        %v444 = vpop.f32.mrf.mxu0
        %445 = vdwg.mxu0
        %447 = vrot.lane.b32.xlu0 %v441, 120
        %v448 = vpop.permute.xlu0 %447
        %450 = vrot.lane.b32.xlu0 %v441, 112
        %v451 = vpop.permute.xlu0 %450
        %453 = vrot.lane.b32.xlu0 %v441, 104
        %v454 = vpop.permute.xlu0 %453
        %v456 = vpack.c.bf16 %v441, %v441
        %v457 = vpack.c.bf16 %v448, %v448
        %v458 = vpack.c.bf16 %v451, %v451
        %v459 = vpack.c.bf16 %v454, %v454
        %461 = vrot.lane.b32.xlu0 %v456, 96
        %v462 = vpop.permute.xlu0 %461
        %vm463 = vcmask 64512
        %v465 = vsel %vm463, %v456, 0
        %v468 = vsel %vm463, %v462, 0
        %470 = vmatprep.subr.bf16.mxu0 0
        %471 = vmatpush1.bf16.xpose.msra.mxu0 0
        %472 = vmatprep.subr.bf16.mxu0 0
        %473 = vmatpush1.bf16.xpose.msra.mxu0 0
        %474 = vmatprep.subr.bf16.mxu0 0
        %475 = vmatpush1.bf16.xpose.msra.mxu0 0
        %476 = vmatprep.subr.bf16.mxu0 0
        %477 = vmatpush1.bf16.xpose.msra.mxu0 0
        %478 = vmatprep.subr.bf16.mxu0 0
        %479 = vmatpush1.bf16.xpose.msra.mxu0 0
        %480 = vmatprep.subr.bf16.mxu0 0
        %481 = vmatpush1.bf16.xpose.msra.mxu0 0
        %482 = vmatprep.subr.bf16.mxu0 0
        %483 = vmatpush1.bf16.xpose.msra.mxu0 0
        %484 = vmatprep.subr.bf16.mxu0 0
        %485 = vmatpush1.bf16.xpose.msra.mxu0 %v468
        %486 = vmatprep.subr.bf16.mxu0 0
        %487 = vmatpush2.bf16.xpose.msra.mxu0 0
        %488 = vmatprep.subr.bf16.mxu0 0
        %489 = vmatpush2.bf16.xpose.msra.mxu0 0
        %490 = vmatprep.subr.bf16.mxu0 0
        %491 = vmatpush2.bf16.xpose.msra.mxu0 0
        %492 = vmatprep.subr.bf16.mxu0 0
        %493 = vmatpush2.bf16.xpose.msra.mxu0 0
        %494 = vmatprep.subr.bf16.mxu0 0
        %495 = vmatpush2.bf16.xpose.msra.mxu0 0
        %496 = vmatprep.subr.bf16.mxu0 0
        %497 = vmatpush2.bf16.xpose.msra.mxu0 0
        %498 = vmatprep.subr.bf16.mxu0 0
        %499 = vmatpush2.bf16.xpose.msra.mxu0 0
        %500 = vmatprep.subr.bf16.mxu0 0
        %501 = vmatpush2.bf16.xpose.msra.mxu0 0
        %502 = vmatprep.mubr.bf16.mxu0 0
        %503 = vmatmul.mubr.bf16.gmra.mxu0 %v465
        %v504 = vpop.f32.mrf.mxu0
        %v505 = vadd.f32 0.0, %v504
        %v506 = vpop.f32.mrf.mxu0
        %v507 = vpop.f32.mrf.mxu0
        %v508 = vpop.f32.mrf.mxu0
        %509 = vdwg.mxu0
        %511 = vrot.lane.b32.xlu0 %v457, 96
        %v512 = vpop.permute.xlu0 %511
        %v514 = vsel %vm463, %v457, 0
        %v517 = vsel %vm463, %v512, 0
        %519 = vmatprep.subr.bf16.mxu0 0
        %520 = vmatpush1.bf16.xpose.msra.mxu0 0
        %521 = vmatprep.subr.bf16.mxu0 0
        %522 = vmatpush1.bf16.xpose.msra.mxu0 0
        %523 = vmatprep.subr.bf16.mxu0 0
        %524 = vmatpush1.bf16.xpose.msra.mxu0 0
        %525 = vmatprep.subr.bf16.mxu0 0
        %526 = vmatpush1.bf16.xpose.msra.mxu0 0
        %527 = vmatprep.subr.bf16.mxu0 0
        %528 = vmatpush1.bf16.xpose.msra.mxu0 0
        %529 = vmatprep.subr.bf16.mxu0 0
        %530 = vmatpush1.bf16.xpose.msra.mxu0 0
        %531 = vmatprep.subr.bf16.mxu0 0
        %532 = vmatpush1.bf16.xpose.msra.mxu0 0
        %533 = vmatprep.subr.bf16.mxu0 0
        %534 = vmatpush1.bf16.xpose.msra.mxu0 %v517
        %535 = vmatprep.subr.bf16.mxu0 0
        %536 = vmatpush2.bf16.xpose.msra.mxu0 0
        %537 = vmatprep.subr.bf16.mxu0 0
        %538 = vmatpush2.bf16.xpose.msra.mxu0 0
        %539 = vmatprep.subr.bf16.mxu0 0
        %540 = vmatpush2.bf16.xpose.msra.mxu0 0
        %541 = vmatprep.subr.bf16.mxu0 0
        %542 = vmatpush2.bf16.xpose.msra.mxu0 0
        %543 = vmatprep.subr.bf16.mxu0 0
        %544 = vmatpush2.bf16.xpose.msra.mxu0 0
        %545 = vmatprep.subr.bf16.mxu0 0
        %546 = vmatpush2.bf16.xpose.msra.mxu0 0
        %547 = vmatprep.subr.bf16.mxu0 0
        %548 = vmatpush2.bf16.xpose.msra.mxu0 0
        %549 = vmatprep.subr.bf16.mxu0 0
        %550 = vmatpush2.bf16.xpose.msra.mxu0 0
        %551 = vmatprep.mubr.bf16.mxu0 0
        %552 = vmatmul.mubr.bf16.gmra.mxu0 %v514
        %v553 = vpop.f32.mrf.mxu0
        %v554 = vadd.f32 0.0, %v553
        %v555 = vpop.f32.mrf.mxu0
        %v556 = vpop.f32.mrf.mxu0
        %v557 = vpop.f32.mrf.mxu0
        %558 = vdwg.mxu0
        %560 = vrot.lane.b32.xlu0 %v458, 96
        %v561 = vpop.permute.xlu0 %560
        %v563 = vsel %vm463, %v458, 0
        %v566 = vsel %vm463, %v561, 0
        %568 = vmatprep.subr.bf16.mxu0 0
        %569 = vmatpush1.bf16.xpose.msra.mxu0 0
        %570 = vmatprep.subr.bf16.mxu0 0
        %571 = vmatpush1.bf16.xpose.msra.mxu0 0
        %572 = vmatprep.subr.bf16.mxu0 0
        %573 = vmatpush1.bf16.xpose.msra.mxu0 0
        %574 = vmatprep.subr.bf16.mxu0 0
        %575 = vmatpush1.bf16.xpose.msra.mxu0 0
        %576 = vmatprep.subr.bf16.mxu0 0
        %577 = vmatpush1.bf16.xpose.msra.mxu0 0
        %578 = vmatprep.subr.bf16.mxu0 0
        %579 = vmatpush1.bf16.xpose.msra.mxu0 0
        %580 = vmatprep.subr.bf16.mxu0 0
        %581 = vmatpush1.bf16.xpose.msra.mxu0 0
        %582 = vmatprep.subr.bf16.mxu0 0
        %583 = vmatpush1.bf16.xpose.msra.mxu0 %v566
        %584 = vmatprep.subr.bf16.mxu0 0
        %585 = vmatpush2.bf16.xpose.msra.mxu0 0
        %586 = vmatprep.subr.bf16.mxu0 0
        %587 = vmatpush2.bf16.xpose.msra.mxu0 0
        %588 = vmatprep.subr.bf16.mxu0 0
        %589 = vmatpush2.bf16.xpose.msra.mxu0 0
        %590 = vmatprep.subr.bf16.mxu0 0
        %591 = vmatpush2.bf16.xpose.msra.mxu0 0
        %592 = vmatprep.subr.bf16.mxu0 0
        %593 = vmatpush2.bf16.xpose.msra.mxu0 0
        %594 = vmatprep.subr.bf16.mxu0 0
        %595 = vmatpush2.bf16.xpose.msra.mxu0 0
        %596 = vmatprep.subr.bf16.mxu0 0
        %597 = vmatpush2.bf16.xpose.msra.mxu0 0
        %598 = vmatprep.subr.bf16.mxu0 0
        %599 = vmatpush2.bf16.xpose.msra.mxu0 0
        %600 = vmatprep.mubr.bf16.mxu0 0
        %601 = vmatmul.mubr.bf16.gmra.mxu0 %v563
        %v602 = vpop.f32.mrf.mxu0
        %v603 = vadd.f32 0.0, %v602
        %v604 = vpop.f32.mrf.mxu0
        %v605 = vpop.f32.mrf.mxu0
        %v606 = vpop.f32.mrf.mxu0
        %607 = vdwg.mxu0
        %609 = vrot.lane.b32.xlu0 %v459, 96
        %v610 = vpop.permute.xlu0 %609
        %v612 = vsel %vm463, %v459, 0
        %v615 = vsel %vm463, %v610, 0
        %617 = vmatprep.subr.bf16.mxu0 0
        %618 = vmatpush1.bf16.xpose.msra.mxu0 0
        %619 = vmatprep.subr.bf16.mxu0 0
        %620 = vmatpush1.bf16.xpose.msra.mxu0 0
        %621 = vmatprep.subr.bf16.mxu0 0
        %622 = vmatpush1.bf16.xpose.msra.mxu0 0
        %623 = vmatprep.subr.bf16.mxu0 0
        %624 = vmatpush1.bf16.xpose.msra.mxu0 0
        %625 = vmatprep.subr.bf16.mxu0 0
        %626 = vmatpush1.bf16.xpose.msra.mxu0 0
        %627 = vmatprep.subr.bf16.mxu0 0
        %628 = vmatpush1.bf16.xpose.msra.mxu0 0
        %629 = vmatprep.subr.bf16.mxu0 0
        %630 = vmatpush1.bf16.xpose.msra.mxu0 0
        %631 = vmatprep.subr.bf16.mxu0 0
        %632 = vmatpush1.bf16.xpose.msra.mxu0 %v615
        %633 = vmatprep.subr.bf16.mxu0 0
        %634 = vmatpush2.bf16.xpose.msra.mxu0 0
        %635 = vmatprep.subr.bf16.mxu0 0
        %636 = vmatpush2.bf16.xpose.msra.mxu0 0
        %637 = vmatprep.subr.bf16.mxu0 0
        %638 = vmatpush2.bf16.xpose.msra.mxu0 0
        %639 = vmatprep.subr.bf16.mxu0 0
        %640 = vmatpush2.bf16.xpose.msra.mxu0 0
        %641 = vmatprep.subr.bf16.mxu0 0
        %642 = vmatpush2.bf16.xpose.msra.mxu0 0
        %643 = vmatprep.subr.bf16.mxu0 0
        %644 = vmatpush2.bf16.xpose.msra.mxu0 0
        %645 = vmatprep.subr.bf16.mxu0 0
        %646 = vmatpush2.bf16.xpose.msra.mxu0 0
        %647 = vmatprep.subr.bf16.mxu0 0
        %648 = vmatpush2.bf16.xpose.msra.mxu0 0
        %649 = vmatprep.mubr.bf16.mxu0 0
        %650 = vmatmul.mubr.bf16.gmra.mxu0 %v612
        %v651 = vpop.f32.mrf.mxu0
        %v652 = vadd.f32 0.0, %v651
        %v653 = vpop.f32.mrf.mxu0
        %v654 = vpop.f32.mrf.mxu0
        %v655 = vpop.f32.mrf.mxu0
        %656 = vdwg.mxu0
        %v657 = vsel %vm463, %v505, -inf
        %658 = vmax.xlane.f32.xlu0 %v657
        %v659 = vpop.xlane.xlu0 %658
        %v660 = vsel %vm463, %v554, -inf
        %661 = vmax.xlane.f32.xlu0 %v660
        %v662 = vpop.xlane.xlu0 %661
        %v663 = vsel %vm463, %v603, -inf
        %664 = vmax.xlane.f32.xlu0 %v663
        %v665 = vpop.xlane.xlu0 %664
        %v666 = vsel %vm463, %v652, -inf
        %667 = vmax.xlane.f32.xlu0 %v666
        %v668 = vpop.xlane.xlu0 %667
        %v669 = vsub.f32 %v505, %v659
        %v670 = vsub.f32 %v554, %v662
        %v671 = vsub.f32 %v603, %v665
        %v672 = vsub.f32 %v652, %v668
        %v673 = vmul.f32 %v669, 1.442695
        %v674 = vpow.pop %v673
        %v675 = vmul.f32 %v670, 1.442695
        %v676 = vpow.pop %v675
        %v677 = vmul.f32 %v671, 1.442695
        %v678 = vpow.pop %v677
        %v679 = vmul.f32 %v672, 1.442695
        %v680 = vpow.pop %v679
        %v681 = vsel %vm463, %v674, 0.0
        %682 = vadd.xlane.f32.xlu0 %v681
        %v683 = vpop.xlane.xlu0 %682
        %v684 = vsel %vm463, %v676, 0.0
        %685 = vadd.xlane.f32.xlu0 %v684
        %v686 = vpop.xlane.xlu0 %685
        %v687 = vsel %vm463, %v678, 0.0
        %688 = vadd.xlane.f32.xlu0 %v687
        %v689 = vpop.xlane.xlu0 %688
        %v690 = vsel %vm463, %v680, 0.0
        %691 = vadd.xlane.f32.xlu0 %v690
        %v692 = vpop.xlane.xlu0 %691
        %v693 = vpack.c.bf16 %v674, %v674
        %v694 = vpack.c.bf16 %v676, %v676
        %v695 = vpack.c.bf16 %v678, %v678
        %v696 = vpack.c.bf16 %v680, %v680
        %697 = vrot.lane.b32.xlu0 %v456, 64
        %v698 = vpop.permute.xlu0 %697
        %v700 = vsel %vm463, %v693, 0
        %vm702 = vcmask 1043456
        %v704 = vsel %vm702, %v698, 0
        %706 = vmatprep.subr.bf16.mxu0 0
        %707 = vmatpush1.bf16.msra.mxu0 0
        %708 = vmatprep.subr.bf16.mxu0 0
        %709 = vmatpush1.bf16.msra.mxu0 0
        %710 = vmatprep.subr.bf16.mxu0 0
        %711 = vmatpush1.bf16.msra.mxu0 0
        %712 = vmatprep.subr.bf16.mxu0 0
        %713 = vmatpush1.bf16.msra.mxu0 0
        %714 = vmatprep.subr.bf16.mxu0 0
        %715 = vmatpush1.bf16.msra.mxu0 0
        %716 = vmatprep.subr.bf16.mxu0 0
        %717 = vmatpush1.bf16.msra.mxu0 0
        %718 = vmatprep.subr.bf16.mxu0 0
        %719 = vmatpush1.bf16.msra.mxu0 0
        %720 = vmatprep.subr.bf16.mxu0 0
        %721 = vmatpush1.bf16.msra.mxu0 %v704
        %722 = vmatprep.subr.bf16.mxu0 0
        %723 = vmatpush2.bf16.msra.mxu0 0
        %724 = vmatprep.subr.bf16.mxu0 0
        %725 = vmatpush2.bf16.msra.mxu0 0
        %726 = vmatprep.subr.bf16.mxu0 0
        %727 = vmatpush2.bf16.msra.mxu0 0
        %728 = vmatprep.subr.bf16.mxu0 0
        %729 = vmatpush2.bf16.msra.mxu0 0
        %730 = vmatprep.subr.bf16.mxu0 0
        %731 = vmatpush2.bf16.msra.mxu0 0
        %732 = vmatprep.subr.bf16.mxu0 0
        %733 = vmatpush2.bf16.msra.mxu0 0
        %734 = vmatprep.subr.bf16.mxu0 0
        %735 = vmatpush2.bf16.msra.mxu0 0
        %736 = vmatprep.subr.bf16.mxu0 0
        %737 = vmatpush2.bf16.msra.mxu0 0
        %738 = vmatprep.mubr.bf16.mxu0 0
        %739 = vmatmul.mubr.bf16.gmra.mxu0 %v700
        %v740 = vpop.f32.mrf.mxu0
        %v741 = vadd.f32 0.0, %v740
        %v742 = vpop.f32.mrf.mxu0
        %v743 = vpop.f32.mrf.mxu0
        %v744 = vpop.f32.mrf.mxu0
        %745 = vdwg.mxu0
        %746 = vrot.lane.b32.xlu0 %v457, 64
        %v747 = vpop.permute.xlu0 %746
        %v749 = vsel %vm463, %v694, 0
        %v752 = vsel %vm702, %v747, 0
        %754 = vmatprep.subr.bf16.mxu0 0
        %755 = vmatpush1.bf16.msra.mxu0 0
        %756 = vmatprep.subr.bf16.mxu0 0
        %757 = vmatpush1.bf16.msra.mxu0 0
        %758 = vmatprep.subr.bf16.mxu0 0
        %759 = vmatpush1.bf16.msra.mxu0 0
        %760 = vmatprep.subr.bf16.mxu0 0
        %761 = vmatpush1.bf16.msra.mxu0 0
        %762 = vmatprep.subr.bf16.mxu0 0
        %763 = vmatpush1.bf16.msra.mxu0 0
        %764 = vmatprep.subr.bf16.mxu0 0
        %765 = vmatpush1.bf16.msra.mxu0 0
        %766 = vmatprep.subr.bf16.mxu0 0
        %767 = vmatpush1.bf16.msra.mxu0 0
        %768 = vmatprep.subr.bf16.mxu0 0
        %769 = vmatpush1.bf16.msra.mxu0 %v752
        %770 = vmatprep.subr.bf16.mxu0 0
        %771 = vmatpush2.bf16.msra.mxu0 0
        %772 = vmatprep.subr.bf16.mxu0 0
        %773 = vmatpush2.bf16.msra.mxu0 0
        %774 = vmatprep.subr.bf16.mxu0 0
        %775 = vmatpush2.bf16.msra.mxu0 0
        %776 = vmatprep.subr.bf16.mxu0 0
        %777 = vmatpush2.bf16.msra.mxu0 0
        %778 = vmatprep.subr.bf16.mxu0 0
        %779 = vmatpush2.bf16.msra.mxu0 0
        %780 = vmatprep.subr.bf16.mxu0 0
        %781 = vmatpush2.bf16.msra.mxu0 0
        %782 = vmatprep.subr.bf16.mxu0 0
        %783 = vmatpush2.bf16.msra.mxu0 0
        %784 = vmatprep.subr.bf16.mxu0 0
        %785 = vmatpush2.bf16.msra.mxu0 0
        %786 = vmatprep.mubr.bf16.mxu0 0
        %787 = vmatmul.mubr.bf16.gmra.mxu0 %v749
        %v788 = vpop.f32.mrf.mxu0
        %v789 = vadd.f32 0.0, %v788
        %v790 = vpop.f32.mrf.mxu0
        %v791 = vpop.f32.mrf.mxu0
        %v792 = vpop.f32.mrf.mxu0
        %793 = vdwg.mxu0
        %794 = vrot.lane.b32.xlu0 %v458, 64
        %v795 = vpop.permute.xlu0 %794
        %v797 = vsel %vm463, %v695, 0
        %v800 = vsel %vm702, %v795, 0
        %802 = vmatprep.subr.bf16.mxu0 0
        %803 = vmatpush1.bf16.msra.mxu0 0
        %804 = vmatprep.subr.bf16.mxu0 0
        %805 = vmatpush1.bf16.msra.mxu0 0
        %806 = vmatprep.subr.bf16.mxu0 0
        %807 = vmatpush1.bf16.msra.mxu0 0
        %808 = vmatprep.subr.bf16.mxu0 0
        %809 = vmatpush1.bf16.msra.mxu0 0
        %810 = vmatprep.subr.bf16.mxu0 0
        %811 = vmatpush1.bf16.msra.mxu0 0
        %812 = vmatprep.subr.bf16.mxu0 0
        %813 = vmatpush1.bf16.msra.mxu0 0
        %814 = vmatprep.subr.bf16.mxu0 0
        %815 = vmatpush1.bf16.msra.mxu0 0
        %816 = vmatprep.subr.bf16.mxu0 0
        %817 = vmatpush1.bf16.msra.mxu0 %v800
        %818 = vmatprep.subr.bf16.mxu0 0
        %819 = vmatpush2.bf16.msra.mxu0 0
        %820 = vmatprep.subr.bf16.mxu0 0
        %821 = vmatpush2.bf16.msra.mxu0 0
        %822 = vmatprep.subr.bf16.mxu0 0
        %823 = vmatpush2.bf16.msra.mxu0 0
        %824 = vmatprep.subr.bf16.mxu0 0
        %825 = vmatpush2.bf16.msra.mxu0 0
        %826 = vmatprep.subr.bf16.mxu0 0
        %827 = vmatpush2.bf16.msra.mxu0 0
        %828 = vmatprep.subr.bf16.mxu0 0
        %829 = vmatpush2.bf16.msra.mxu0 0
        %830 = vmatprep.subr.bf16.mxu0 0
        %831 = vmatpush2.bf16.msra.mxu0 0
        %832 = vmatprep.subr.bf16.mxu0 0
        %833 = vmatpush2.bf16.msra.mxu0 0
        %834 = vmatprep.mubr.bf16.mxu0 0
        %835 = vmatmul.mubr.bf16.gmra.mxu0 %v797
        %v836 = vpop.f32.mrf.mxu0
        %v837 = vadd.f32 0.0, %v836
        %v838 = vpop.f32.mrf.mxu0
        %v839 = vpop.f32.mrf.mxu0
        %v840 = vpop.f32.mrf.mxu0
        %841 = vdwg.mxu0
        %842 = vrot.lane.b32.xlu0 %v459, 64
        %v843 = vpop.permute.xlu0 %842
        %v845 = vsel %vm463, %v696, 0
        %v848 = vsel %vm702, %v843, 0
        %850 = vmatprep.subr.bf16.mxu0 0
        %851 = vmatpush1.bf16.msra.mxu0 0
        %852 = vmatprep.subr.bf16.mxu0 0
        %853 = vmatpush1.bf16.msra.mxu0 0
        %854 = vmatprep.subr.bf16.mxu0 0
        %855 = vmatpush1.bf16.msra.mxu0 0
        %856 = vmatprep.subr.bf16.mxu0 0
        %857 = vmatpush1.bf16.msra.mxu0 0
        %858 = vmatprep.subr.bf16.mxu0 0
        %859 = vmatpush1.bf16.msra.mxu0 0
        %860 = vmatprep.subr.bf16.mxu0 0
        %861 = vmatpush1.bf16.msra.mxu0 0
        %862 = vmatprep.subr.bf16.mxu0 0
        %863 = vmatpush1.bf16.msra.mxu0 0
        %864 = vmatprep.subr.bf16.mxu0 0
        %865 = vmatpush1.bf16.msra.mxu0 %v848
        %866 = vmatprep.subr.bf16.mxu0 0
        %867 = vmatpush2.bf16.msra.mxu0 0
        %868 = vmatprep.subr.bf16.mxu0 0
        %869 = vmatpush2.bf16.msra.mxu0 0
        %870 = vmatprep.subr.bf16.mxu0 0
        %871 = vmatpush2.bf16.msra.mxu0 0
        %872 = vmatprep.subr.bf16.mxu0 0
        %873 = vmatpush2.bf16.msra.mxu0 0
        %874 = vmatprep.subr.bf16.mxu0 0
        %875 = vmatpush2.bf16.msra.mxu0 0
        %876 = vmatprep.subr.bf16.mxu0 0
        %877 = vmatpush2.bf16.msra.mxu0 0
        %878 = vmatprep.subr.bf16.mxu0 0
        %879 = vmatpush2.bf16.msra.mxu0 0
        %880 = vmatprep.subr.bf16.mxu0 0
        %881 = vmatpush2.bf16.msra.mxu0 0
        %882 = vmatprep.mubr.bf16.mxu0 0
        %883 = vmatmul.mubr.bf16.gmra.mxu0 %v845
        %v884 = vpop.f32.mrf.mxu0
        %v885 = vadd.f32 0.0, %v884
        %v886 = vpop.f32.mrf.mxu0
        %v887 = vpop.f32.mrf.mxu0
        %v888 = vpop.f32.mrf.mxu0
        %889 = vdwg.mxu0
        %v890 = vrcp.pop %v683
        %v891 = vrcp.pop %v686
        %v892 = vrcp.pop %v689
        %v893 = vrcp.pop %v692
        %v894 = vmul.f32 %v741, %v890
        %v895 = vmul.f32 %v789, %v891
        %v896 = vmul.f32 %v837, %v892
        %v897 = vmul.f32 %v885, %v893
        %899 = vrot.lane.b32.xlu0 %v895, 8
        %v900 = vpop.permute.xlu0 %899
        %903 = vrot.lane.b32.xlu0 %v896, 16
        %v904 = vpop.permute.xlu0 %903
        %907 = vrot.lane.b32.xlu0 %v897, 24
        %v908 = vpop.permute.xlu0 %907
        %v910 = vsel %vm463, %v894, %v900
        %vm911 = vcmask 130048
        %v912 = vsel %vm911, %v910, %v904
        %vm913 = vcmask 195584
        %v914 = vsel %vm913, %v912, %v908
        %v915 = vpack.c.bf16 %v914, %v914
        %v916 = vld [vmem:[%s3] sm:$0xf]
        %v917 = vld [vmem:[%s3 + $0x4] sm:$0xf]
        %v918 = vld [vmem:[%s3 + $0x8] sm:$0xf]
        %v919 = vld [vmem:[%s3 + $0xc] sm:$0xf]
        %v920 = vlaneseq
        %v921 = vshrl.u32 %v920, 7
        %v922 = vsub.s32 1, %v921
        %v923 = vrot.slane %v379, %v922
        %v928 = vunpack.c.l.b16 %v916
        %v929 = vunpack.c.l.b16 %v917
        %v930 = vunpack.c.l.b16 %v918
        %v931 = vunpack.c.l.b16 %v919
        %v932 = vpack.c.b16 %v929, %v928
        %v933 = vpack.c.b16 %v931, %v930
        %v937 = vsel %vm402, %v915, 0
        %939 = vmatprep.subr.bf16.mxu0 0
        %940 = vmatpush1.bf16.msra.mxu0 0
        %941 = vmatprep.subr.bf16.mxu0 0
        %942 = vmatpush1.bf16.msra.mxu0 0
        %943 = vmatprep.subr.bf16.mxu0 0
        %944 = vmatpush1.bf16.msra.mxu0 0
        %945 = vmatprep.subr.bf16.mxu0 0
        %946 = vmatpush1.bf16.msra.mxu0 0
        %947 = vmatprep.subr.bf16.mxu0 0
        %948 = vmatpush1.bf16.msra.mxu0 0
        %949 = vmatprep.subr.bf16.mxu0 0
        %950 = vmatpush1.bf16.msra.mxu0 0
        %951 = vmatprep.subr.bf16.mxu0 0
        %952 = vmatpush1.bf16.msra.mxu0 %v933
        %953 = vmatprep.subr.bf16.mxu0 0
        %954 = vmatpush1.bf16.msra.mxu0 %v932
        %955 = vmatprep.subr.bf16.mxu0 0
        %956 = vmatpush2.bf16.msra.mxu0 0
        %957 = vmatprep.subr.bf16.mxu0 0
        %958 = vmatpush2.bf16.msra.mxu0 0
        %959 = vmatprep.subr.bf16.mxu0 0
        %960 = vmatpush2.bf16.msra.mxu0 0
        %961 = vmatprep.subr.bf16.mxu0 0
        %962 = vmatpush2.bf16.msra.mxu0 0
        %963 = vmatprep.subr.bf16.mxu0 0
        %964 = vmatpush2.bf16.msra.mxu0 0
        %965 = vmatprep.subr.bf16.mxu0 0
        %966 = vmatpush2.bf16.msra.mxu0 0
        %967 = vmatprep.subr.bf16.mxu0 0
        %968 = vmatpush2.bf16.msra.mxu0 0
        %969 = vmatprep.subr.bf16.mxu0 0
        %970 = vmatpush2.bf16.msra.mxu0 0
        %971 = vmatprep.mubr.bf16.mxu0 0
        %972 = vmatmul.mubr.bf16.gmra.mxu0 %v937
        %v973 = vpop.f32.mrf.mxu0
        %v974 = vadd.f32 %v923, %v973
        %v975 = vpop.f32.mrf.mxu0
        %v976 = vpop.f32.mrf.mxu0
        %v977 = vpop.f32.mrf.mxu0
        %978 = vdwg.mxu0
        %v979 = vadd.f32 %v376, %v974
        %v980 = vsel %vm402, %v979, 0.0
        %981 = vadd.xlane.f32.xlu0 %v980
        %v982 = vpop.xlane.xlu0 %981
        %v983 = vrcp.pop 32.0
        %v984 = vmul.f32 %v982, %v983
        %v985 = vsub.f32 %v979, %v984
        %v986 = vmul.f32 %v985, %v985
        %v987 = vsel %vm402, %v986, 0.0
        %988 = vadd.xlane.f32.xlu0 %v987
        %v989 = vpop.xlane.xlu0 %988
        %v990 = vmul.f32 %v989, %v983
        %v991 = vadd.f32 %v990, 1e-05
        %v992 = vrsqrt.pop %v991
        %v993 = vmul.f32 %v985, %v992
        %v994 = vlaneseq
        %v995 = vshrl.u32 %v994, 7
        %v996 = vsub.s32 5, %v995
        %v997 = vrot.slane %v379, %v996
        %v998 = vmul.f32 %v993, %v997
        %v999 = vlaneseq
        %v1000 = vshrl.u32 %v999, 7
        %v1001 = vsub.s32 6, %v1000
        %v1002 = vrot.slane %v379, %v1001
        %v1003 = vadd.f32 %v998, %v1002
        %v1004 = vpack.c.bf16 %v1003, %v1003
        %v1005 = vld [vmem:[%s4] sm:$0xf]
        %v1006 = vld [vmem:[%s4 + $0x4] sm:$0xf]
        %v1007 = vld [vmem:[%s4 + $0x8] sm:$0xf]
        %v1008 = vld [vmem:[%s4 + $0xc] sm:$0xf]
        %v1009 = vlaneseq
        %v1010 = vshrl.u32 %v1009, 7
        %v1011 = vsub.s32 2, %v1010
        %v1012 = vrot.slane %v379, %v1011
        %v1017 = vunpack.c.l.b16 %v1005
        %v1018 = vunpack.c.l.b16 %v1006
        %v1019 = vunpack.c.l.b16 %v1007
        %v1020 = vunpack.c.l.b16 %v1008
        %v1021 = vpack.c.b16 %v1018, %v1017
        %v1022 = vpack.c.b16 %v1020, %v1019
        %v1026 = vsel %vm402, %v1004, 0
        %1028 = vmatprep.subr.bf16.mxu0 0
        %1029 = vmatpush1.bf16.msra.mxu0 0
        %1030 = vmatprep.subr.bf16.mxu0 0
        %1031 = vmatpush1.bf16.msra.mxu0 0
        %1032 = vmatprep.subr.bf16.mxu0 0
        %1033 = vmatpush1.bf16.msra.mxu0 0
        %1034 = vmatprep.subr.bf16.mxu0 0
        %1035 = vmatpush1.bf16.msra.mxu0 0
        %1036 = vmatprep.subr.bf16.mxu0 0
        %1037 = vmatpush1.bf16.msra.mxu0 0
        %1038 = vmatprep.subr.bf16.mxu0 0
        %1039 = vmatpush1.bf16.msra.mxu0 0
        %1040 = vmatprep.subr.bf16.mxu0 0
        %1041 = vmatpush1.bf16.msra.mxu0 %v1022
        %1042 = vmatprep.subr.bf16.mxu0 0
        %1043 = vmatpush1.bf16.msra.mxu0 %v1021
        %1044 = vmatprep.subr.bf16.mxu0 0
        %1045 = vmatpush2.bf16.msra.mxu0 0
        %1046 = vmatprep.subr.bf16.mxu0 0
        %1047 = vmatpush2.bf16.msra.mxu0 0
        %1048 = vmatprep.subr.bf16.mxu0 0
        %1049 = vmatpush2.bf16.msra.mxu0 0
        %1050 = vmatprep.subr.bf16.mxu0 0
        %1051 = vmatpush2.bf16.msra.mxu0 0
        %1052 = vmatprep.subr.bf16.mxu0 0
        %1053 = vmatpush2.bf16.msra.mxu0 0
        %1054 = vmatprep.subr.bf16.mxu0 0
        %1055 = vmatpush2.bf16.msra.mxu0 0
        %1056 = vmatprep.subr.bf16.mxu0 0
        %1057 = vmatpush2.bf16.msra.mxu0 0
        %1058 = vmatprep.subr.bf16.mxu0 0
        %1059 = vmatpush2.bf16.msra.mxu0 0
        %1060 = vmatprep.mubr.bf16.mxu0 0
        %1061 = vmatmul.mubr.bf16.gmra.mxu0 %v1026
        %v1062 = vpop.f32.mrf.mxu0
        %v1063 = vadd.f32 %v1012, %v1062
        %v1064 = vpop.f32.mrf.mxu0
        %v1065 = vpop.f32.mrf.mxu0
        %v1066 = vpop.f32.mrf.mxu0
        %1067 = vdwg.mxu0
        %v1068 = vpack.c.bf16 %v378, %v377
        %v1069 = vld [vmem:[%s5] sm:$0xf]
        %v1070 = vld [vmem:[%s5 + $0x4] sm:$0xf]
        %v1071 = vld [vmem:[%s5 + $0x8] sm:$0xf]
        %v1072 = vld [vmem:[%s5 + $0xc] sm:$0xf]
        %v1073 = vlaneseq
        %v1074 = vshrl.u32 %v1073, 7
        %v1075 = vsub.s32 3, %v1074
        %v1076 = vrot.slane %v379, %v1075
        %v1081 = vunpack.c.l.b16 %v1069
        %v1082 = vunpack.c.l.b16 %v1070
        %v1083 = vunpack.c.l.b16 %v1071
        %v1084 = vunpack.c.l.b16 %v1072
        %v1085 = vpack.c.b16 %v1082, %v1081
        %v1086 = vpack.c.b16 %v1084, %v1083
        %v1090 = vsel %vm402, %v1068, 0
        %1092 = vmatprep.subr.bf16.mxu0 0
        %1093 = vmatpush1.bf16.msra.mxu0 0
        %1094 = vmatprep.subr.bf16.mxu0 0
        %1095 = vmatpush1.bf16.msra.mxu0 0
        %1096 = vmatprep.subr.bf16.mxu0 0
        %1097 = vmatpush1.bf16.msra.mxu0 0
        %1098 = vmatprep.subr.bf16.mxu0 0
        %1099 = vmatpush1.bf16.msra.mxu0 0
        %1100 = vmatprep.subr.bf16.mxu0 0
        %1101 = vmatpush1.bf16.msra.mxu0 0
        %1102 = vmatprep.subr.bf16.mxu0 0
        %1103 = vmatpush1.bf16.msra.mxu0 0
        %1104 = vmatprep.subr.bf16.mxu0 0
        %1105 = vmatpush1.bf16.msra.mxu0 %v1086
        %1106 = vmatprep.subr.bf16.mxu0 0
        %1107 = vmatpush1.bf16.msra.mxu0 %v1085
        %1108 = vmatprep.subr.bf16.mxu0 0
        %1109 = vmatpush2.bf16.msra.mxu0 0
        %1110 = vmatprep.subr.bf16.mxu0 0
        %1111 = vmatpush2.bf16.msra.mxu0 0
        %1112 = vmatprep.subr.bf16.mxu0 0
        %1113 = vmatpush2.bf16.msra.mxu0 0
        %1114 = vmatprep.subr.bf16.mxu0 0
        %1115 = vmatpush2.bf16.msra.mxu0 0
        %1116 = vmatprep.subr.bf16.mxu0 0
        %1117 = vmatpush2.bf16.msra.mxu0 0
        %1118 = vmatprep.subr.bf16.mxu0 0
        %1119 = vmatpush2.bf16.msra.mxu0 0
        %1120 = vmatprep.subr.bf16.mxu0 0
        %1121 = vmatpush2.bf16.msra.mxu0 0
        %1122 = vmatprep.subr.bf16.mxu0 0
        %1123 = vmatpush2.bf16.msra.mxu0 0
        %1124 = vmatprep.mubr.bf16.mxu0 0
        %1125 = vmatmul.mubr.bf16.gmra.mxu0 %v1090
        %v1126 = vpop.f32.mrf.mxu0
        %v1127 = vadd.f32 %v1076, %v1126
        %v1128 = vpop.f32.mrf.mxu0
        %v1129 = vpop.f32.mrf.mxu0
        %v1130 = vadd.f32 %v1076, %v1129
        %v1131 = vpop.f32.mrf.mxu0
        %1132 = vdwg.mxu0
        %1134 = vrot.lane.b32.xlu0 %v1063, 120
        %v1135 = vpop.permute.xlu0 %1134
        %1137 = vrot.lane.b32.xlu0 %v1063, 112
        %v1138 = vpop.permute.xlu0 %1137
        %1140 = vrot.lane.b32.xlu0 %v1063, 104
        %v1141 = vpop.permute.xlu0 %1140
        %1145 = vrot.lane.b32.xlu0 %v1127, 120
        %v1146 = vpop.permute.xlu0 %1145
        %1147 = vrot.lane.b32.xlu0 %v1130, 120
        %v1148 = vpop.permute.xlu0 %1147
        %1151 = vrot.lane.b32.xlu0 %v1127, 112
        %v1152 = vpop.permute.xlu0 %1151
        %1153 = vrot.lane.b32.xlu0 %v1130, 112
        %v1154 = vpop.permute.xlu0 %1153
        %1157 = vrot.lane.b32.xlu0 %v1127, 104
        %v1158 = vpop.permute.xlu0 %1157
        %1159 = vrot.lane.b32.xlu0 %v1130, 104
        %v1160 = vpop.permute.xlu0 %1159
        %v1163 = vpack.c.bf16 %v1063, %v1063
        %v1164 = vpack.c.bf16 %v1135, %v1135
        %v1165 = vpack.c.bf16 %v1138, %v1138
        %v1166 = vpack.c.bf16 %v1141, %v1141
        %v1167 = vpack.c.bf16 %v1130, %v1127
        %v1168 = vpack.c.bf16 %v1148, %v1146
        %v1169 = vpack.c.bf16 %v1154, %v1152
        %v1170 = vpack.c.bf16 %v1160, %v1158
        %v1172 = vsel %vm463, %v1163, 0
        %v1175 = vsel %vm463, %v1167, 0
        %1177 = vmatprep.subr.bf16.mxu0 0
        %1178 = vmatpush1.bf16.xpose.msra.mxu0 0
        %1179 = vmatprep.subr.bf16.mxu0 0
        %1180 = vmatpush1.bf16.xpose.msra.mxu0 0
        %1181 = vmatprep.subr.bf16.mxu0 0
        %1182 = vmatpush1.bf16.xpose.msra.mxu0 0
        %1183 = vmatprep.subr.bf16.mxu0 0
        %1184 = vmatpush1.bf16.xpose.msra.mxu0 0
        %1185 = vmatprep.subr.bf16.mxu0 0
        %1186 = vmatpush1.bf16.xpose.msra.mxu0 0
        %1187 = vmatprep.subr.bf16.mxu0 0
        %1188 = vmatpush1.bf16.xpose.msra.mxu0 0
        %1189 = vmatprep.subr.bf16.mxu0 0
        %1190 = vmatpush1.bf16.xpose.msra.mxu0 0
        %1191 = vmatprep.subr.bf16.mxu0 0
        %1192 = vmatpush1.bf16.xpose.msra.mxu0 %v1175
        %1193 = vmatprep.subr.bf16.mxu0 0
        %1194 = vmatpush2.bf16.xpose.msra.mxu0 0
        %1195 = vmatprep.subr.bf16.mxu0 0
        %1196 = vmatpush2.bf16.xpose.msra.mxu0 0
        %1197 = vmatprep.subr.bf16.mxu0 0
        %1198 = vmatpush2.bf16.xpose.msra.mxu0 0
        %1199 = vmatprep.subr.bf16.mxu0 0
        %1200 = vmatpush2.bf16.xpose.msra.mxu0 0
        %1201 = vmatprep.subr.bf16.mxu0 0
        %1202 = vmatpush2.bf16.xpose.msra.mxu0 0
        %1203 = vmatprep.subr.bf16.mxu0 0
        %1204 = vmatpush2.bf16.xpose.msra.mxu0 0
        %1205 = vmatprep.subr.bf16.mxu0 0
        %1206 = vmatpush2.bf16.xpose.msra.mxu0 0
        %1207 = vmatprep.subr.bf16.mxu0 0
        %1208 = vmatpush2.bf16.xpose.msra.mxu0 0
        %1209 = vmatprep.mubr.bf16.mxu0 0
        %1210 = vmatmul.mubr.bf16.gmra.mxu0 %v1172
        %v1211 = vpop.f32.mrf.mxu0
        %v1212 = vadd.f32 0.0, %v1211
        %v1213 = vpop.f32.mrf.mxu0
        %v1214 = vpop.f32.mrf.mxu0
        %v1215 = vpop.f32.mrf.mxu0
        %1216 = vdwg.mxu0
        %v1218 = vsel %vm463, %v1164, 0
        %v1221 = vsel %vm463, %v1168, 0
        %1223 = vmatprep.subr.bf16.mxu0 0
        %1224 = vmatpush1.bf16.xpose.msra.mxu0 0
        %1225 = vmatprep.subr.bf16.mxu0 0
        %1226 = vmatpush1.bf16.xpose.msra.mxu0 0
        %1227 = vmatprep.subr.bf16.mxu0 0
        %1228 = vmatpush1.bf16.xpose.msra.mxu0 0
        %1229 = vmatprep.subr.bf16.mxu0 0
        %1230 = vmatpush1.bf16.xpose.msra.mxu0 0
        %1231 = vmatprep.subr.bf16.mxu0 0
        %1232 = vmatpush1.bf16.xpose.msra.mxu0 0
        %1233 = vmatprep.subr.bf16.mxu0 0
        %1234 = vmatpush1.bf16.xpose.msra.mxu0 0
        %1235 = vmatprep.subr.bf16.mxu0 0
        %1236 = vmatpush1.bf16.xpose.msra.mxu0 0
        %1237 = vmatprep.subr.bf16.mxu0 0
        %1238 = vmatpush1.bf16.xpose.msra.mxu0 %v1221
        %1239 = vmatprep.subr.bf16.mxu0 0
        %1240 = vmatpush2.bf16.xpose.msra.mxu0 0
        %1241 = vmatprep.subr.bf16.mxu0 0
        %1242 = vmatpush2.bf16.xpose.msra.mxu0 0
        %1243 = vmatprep.subr.bf16.mxu0 0
        %1244 = vmatpush2.bf16.xpose.msra.mxu0 0
        %1245 = vmatprep.subr.bf16.mxu0 0
        %1246 = vmatpush2.bf16.xpose.msra.mxu0 0
        %1247 = vmatprep.subr.bf16.mxu0 0
        %1248 = vmatpush2.bf16.xpose.msra.mxu0 0
        %1249 = vmatprep.subr.bf16.mxu0 0
        %1250 = vmatpush2.bf16.xpose.msra.mxu0 0
        %1251 = vmatprep.subr.bf16.mxu0 0
        %1252 = vmatpush2.bf16.xpose.msra.mxu0 0
        %1253 = vmatprep.subr.bf16.mxu0 0
        %1254 = vmatpush2.bf16.xpose.msra.mxu0 0
        %1255 = vmatprep.mubr.bf16.mxu0 0
        %1256 = vmatmul.mubr.bf16.gmra.mxu0 %v1218
        %v1257 = vpop.f32.mrf.mxu0
        %v1258 = vadd.f32 0.0, %v1257
        %v1259 = vpop.f32.mrf.mxu0
        %v1260 = vpop.f32.mrf.mxu0
        %v1261 = vpop.f32.mrf.mxu0
        %1262 = vdwg.mxu0
        %v1264 = vsel %vm463, %v1165, 0
        %v1267 = vsel %vm463, %v1169, 0
        %1269 = vmatprep.subr.bf16.mxu0 0
        %1270 = vmatpush1.bf16.xpose.msra.mxu0 0
        %1271 = vmatprep.subr.bf16.mxu0 0
        %1272 = vmatpush1.bf16.xpose.msra.mxu0 0
        %1273 = vmatprep.subr.bf16.mxu0 0
        %1274 = vmatpush1.bf16.xpose.msra.mxu0 0
        %1275 = vmatprep.subr.bf16.mxu0 0
        %1276 = vmatpush1.bf16.xpose.msra.mxu0 0
        %1277 = vmatprep.subr.bf16.mxu0 0
        %1278 = vmatpush1.bf16.xpose.msra.mxu0 0
        %1279 = vmatprep.subr.bf16.mxu0 0
        %1280 = vmatpush1.bf16.xpose.msra.mxu0 0
        %1281 = vmatprep.subr.bf16.mxu0 0
        %1282 = vmatpush1.bf16.xpose.msra.mxu0 0
        %1283 = vmatprep.subr.bf16.mxu0 0
        %1284 = vmatpush1.bf16.xpose.msra.mxu0 %v1267
        %1285 = vmatprep.subr.bf16.mxu0 0
        %1286 = vmatpush2.bf16.xpose.msra.mxu0 0
        %1287 = vmatprep.subr.bf16.mxu0 0
        %1288 = vmatpush2.bf16.xpose.msra.mxu0 0
        %1289 = vmatprep.subr.bf16.mxu0 0
        %1290 = vmatpush2.bf16.xpose.msra.mxu0 0
        %1291 = vmatprep.subr.bf16.mxu0 0
        %1292 = vmatpush2.bf16.xpose.msra.mxu0 0
        %1293 = vmatprep.subr.bf16.mxu0 0
        %1294 = vmatpush2.bf16.xpose.msra.mxu0 0
        %1295 = vmatprep.subr.bf16.mxu0 0
        %1296 = vmatpush2.bf16.xpose.msra.mxu0 0
        %1297 = vmatprep.subr.bf16.mxu0 0
        %1298 = vmatpush2.bf16.xpose.msra.mxu0 0
        %1299 = vmatprep.subr.bf16.mxu0 0
        %1300 = vmatpush2.bf16.xpose.msra.mxu0 0
        %1301 = vmatprep.mubr.bf16.mxu0 0
        %1302 = vmatmul.mubr.bf16.gmra.mxu0 %v1264
        %v1303 = vpop.f32.mrf.mxu0
        %v1304 = vadd.f32 0.0, %v1303
        %v1305 = vpop.f32.mrf.mxu0
        %v1306 = vpop.f32.mrf.mxu0
        %v1307 = vpop.f32.mrf.mxu0
        %1308 = vdwg.mxu0
        %v1310 = vsel %vm463, %v1166, 0
        %v1313 = vsel %vm463, %v1170, 0
        %1315 = vmatprep.subr.bf16.mxu0 0
        %1316 = vmatpush1.bf16.xpose.msra.mxu0 0
        %1317 = vmatprep.subr.bf16.mxu0 0
        %1318 = vmatpush1.bf16.xpose.msra.mxu0 0
        %1319 = vmatprep.subr.bf16.mxu0 0
        %1320 = vmatpush1.bf16.xpose.msra.mxu0 0
        %1321 = vmatprep.subr.bf16.mxu0 0
        %1322 = vmatpush1.bf16.xpose.msra.mxu0 0
        %1323 = vmatprep.subr.bf16.mxu0 0
        %1324 = vmatpush1.bf16.xpose.msra.mxu0 0
        %1325 = vmatprep.subr.bf16.mxu0 0
        %1326 = vmatpush1.bf16.xpose.msra.mxu0 0
        %1327 = vmatprep.subr.bf16.mxu0 0
        %1328 = vmatpush1.bf16.xpose.msra.mxu0 0
        %1329 = vmatprep.subr.bf16.mxu0 0
        %1330 = vmatpush1.bf16.xpose.msra.mxu0 %v1313
        %1331 = vmatprep.subr.bf16.mxu0 0
        %1332 = vmatpush2.bf16.xpose.msra.mxu0 0
        %1333 = vmatprep.subr.bf16.mxu0 0
        %1334 = vmatpush2.bf16.xpose.msra.mxu0 0
        %1335 = vmatprep.subr.bf16.mxu0 0
        %1336 = vmatpush2.bf16.xpose.msra.mxu0 0
        %1337 = vmatprep.subr.bf16.mxu0 0
        %1338 = vmatpush2.bf16.xpose.msra.mxu0 0
        %1339 = vmatprep.subr.bf16.mxu0 0
        %1340 = vmatpush2.bf16.xpose.msra.mxu0 0
        %1341 = vmatprep.subr.bf16.mxu0 0
        %1342 = vmatpush2.bf16.xpose.msra.mxu0 0
        %1343 = vmatprep.subr.bf16.mxu0 0
        %1344 = vmatpush2.bf16.xpose.msra.mxu0 0
        %1345 = vmatprep.subr.bf16.mxu0 0
        %1346 = vmatpush2.bf16.xpose.msra.mxu0 0
        %1347 = vmatprep.mubr.bf16.mxu0 0
        %1348 = vmatmul.mubr.bf16.gmra.mxu0 %v1310
        %v1349 = vpop.f32.mrf.mxu0
        %v1350 = vadd.f32 0.0, %v1349
        %v1351 = vpop.f32.mrf.mxu0
        %v1352 = vpop.f32.mrf.mxu0
        %v1353 = vpop.f32.mrf.mxu0
        %1354 = vdwg.mxu0
        %v1355 = vsel %vm911, %v1212, -inf
        %1356 = vmax.xlane.f32.xlu0 %v1355
        %v1357 = vpop.xlane.xlu0 %1356
        %v1358 = vsel %vm911, %v1258, -inf
        %1359 = vmax.xlane.f32.xlu0 %v1358
        %v1360 = vpop.xlane.xlu0 %1359
        %v1361 = vsel %vm911, %v1304, -inf
        %1362 = vmax.xlane.f32.xlu0 %v1361
        %v1363 = vpop.xlane.xlu0 %1362
        %v1364 = vsel %vm911, %v1350, -inf
        %1365 = vmax.xlane.f32.xlu0 %v1364
        %v1366 = vpop.xlane.xlu0 %1365
        %v1367 = vsub.f32 %v1212, %v1357
        %v1368 = vsub.f32 %v1258, %v1360
        %v1369 = vsub.f32 %v1304, %v1363
        %v1370 = vsub.f32 %v1350, %v1366
        %v1371 = vmul.f32 %v1367, 1.442695
        %v1372 = vpow.pop %v1371
        %v1373 = vmul.f32 %v1368, 1.442695
        %v1374 = vpow.pop %v1373
        %v1375 = vmul.f32 %v1369, 1.442695
        %v1376 = vpow.pop %v1375
        %v1377 = vmul.f32 %v1370, 1.442695
        %v1378 = vpow.pop %v1377
        %v1379 = vsel %vm911, %v1372, 0.0
        %1380 = vadd.xlane.f32.xlu0 %v1379
        %v1381 = vpop.xlane.xlu0 %1380
        %v1382 = vsel %vm911, %v1374, 0.0
        %1383 = vadd.xlane.f32.xlu0 %v1382
        %v1384 = vpop.xlane.xlu0 %1383
        %v1385 = vsel %vm911, %v1376, 0.0
        %1386 = vadd.xlane.f32.xlu0 %v1385
        %v1387 = vpop.xlane.xlu0 %1386
        %v1388 = vsel %vm911, %v1378, 0.0
        %1389 = vadd.xlane.f32.xlu0 %v1388
        %v1390 = vpop.xlane.xlu0 %1389
        %v1391 = vpack.c.bf16 %v1372, %v1372
        %v1392 = vpack.c.bf16 %v1374, %v1374
        %v1393 = vpack.c.bf16 %v1376, %v1376
        %v1394 = vpack.c.bf16 %v1378, %v1378
        %1396 = vrot.lane.b32.xlu0 %v1167, 96
        %v1397 = vpop.permute.xlu0 %1396
        %v1400 = vsel %vm911, %v1391, 0
        %1402 = vmatprep.subr.bf16.mxu0 0
        %1403 = vmatpush1.bf16.msra.mxu0 0
        %1404 = vmatprep.subr.bf16.mxu0 0
        %1405 = vmatpush1.bf16.msra.mxu0 0
        %1406 = vmatprep.subr.bf16.mxu0 0
        %1407 = vmatpush1.bf16.msra.mxu0 0
        %1408 = vmatprep.subr.bf16.mxu0 0
        %1409 = vmatpush1.bf16.msra.mxu0 0
        %1410 = vmatprep.subr.bf16.mxu0 0
        %1411 = vmatpush1.bf16.msra.mxu0 0
        %1412 = vmatprep.subr.bf16.mxu0 0
        %1413 = vmatpush1.bf16.msra.mxu0 0
        %1414 = vmatprep.subr.bf16.mxu0 0
        %1415 = vmatpush1.bf16.msra.mxu0 0
        %1416 = vmatprep.subr.bf16.mxu0 0
        %1417 = vmatpush1.bf16.msra.mxu0 %v1397
        %1418 = vmatprep.subr.bf16.mxu0 0
        %1419 = vmatpush2.bf16.msra.mxu0 0
        %1420 = vmatprep.subr.bf16.mxu0 0
        %1421 = vmatpush2.bf16.msra.mxu0 0
        %1422 = vmatprep.subr.bf16.mxu0 0
        %1423 = vmatpush2.bf16.msra.mxu0 0
        %1424 = vmatprep.subr.bf16.mxu0 0
        %1425 = vmatpush2.bf16.msra.mxu0 0
        %1426 = vmatprep.subr.bf16.mxu0 0
        %1427 = vmatpush2.bf16.msra.mxu0 0
        %1428 = vmatprep.subr.bf16.mxu0 0
        %1429 = vmatpush2.bf16.msra.mxu0 0
        %1430 = vmatprep.subr.bf16.mxu0 0
        %1431 = vmatpush2.bf16.msra.mxu0 0
        %1432 = vmatprep.subr.bf16.mxu0 0
        %1433 = vmatpush2.bf16.msra.mxu0 0
        %1434 = vmatprep.mubr.bf16.mxu0 0
        %1435 = vmatmul.mubr.bf16.gmra.mxu0 %v1400
        %v1436 = vpop.f32.mrf.mxu0
        %v1437 = vadd.f32 0.0, %v1436
        %v1438 = vpop.f32.mrf.mxu0
        %v1439 = vpop.f32.mrf.mxu0
        %v1440 = vpop.f32.mrf.mxu0
        %1441 = vdwg.mxu0
        %1443 = vrot.lane.b32.xlu0 %v1168, 96
        %v1444 = vpop.permute.xlu0 %1443
        %v1447 = vsel %vm911, %v1392, 0
        %1449 = vmatprep.subr.bf16.mxu0 0
        %1450 = vmatpush1.bf16.msra.mxu0 0
        %1451 = vmatprep.subr.bf16.mxu0 0
        %1452 = vmatpush1.bf16.msra.mxu0 0
        %1453 = vmatprep.subr.bf16.mxu0 0
        %1454 = vmatpush1.bf16.msra.mxu0 0
        %1455 = vmatprep.subr.bf16.mxu0 0
        %1456 = vmatpush1.bf16.msra.mxu0 0
        %1457 = vmatprep.subr.bf16.mxu0 0
        %1458 = vmatpush1.bf16.msra.mxu0 0
        %1459 = vmatprep.subr.bf16.mxu0 0
        %1460 = vmatpush1.bf16.msra.mxu0 0
        %1461 = vmatprep.subr.bf16.mxu0 0
        %1462 = vmatpush1.bf16.msra.mxu0 0
        %1463 = vmatprep.subr.bf16.mxu0 0
        %1464 = vmatpush1.bf16.msra.mxu0 %v1444
        %1465 = vmatprep.subr.bf16.mxu0 0
        %1466 = vmatpush2.bf16.msra.mxu0 0
        %1467 = vmatprep.subr.bf16.mxu0 0
        %1468 = vmatpush2.bf16.msra.mxu0 0
        %1469 = vmatprep.subr.bf16.mxu0 0
        %1470 = vmatpush2.bf16.msra.mxu0 0
        %1471 = vmatprep.subr.bf16.mxu0 0
        %1472 = vmatpush2.bf16.msra.mxu0 0
        %1473 = vmatprep.subr.bf16.mxu0 0
        %1474 = vmatpush2.bf16.msra.mxu0 0
        %1475 = vmatprep.subr.bf16.mxu0 0
        %1476 = vmatpush2.bf16.msra.mxu0 0
        %1477 = vmatprep.subr.bf16.mxu0 0
        %1478 = vmatpush2.bf16.msra.mxu0 0
        %1479 = vmatprep.subr.bf16.mxu0 0
        %1480 = vmatpush2.bf16.msra.mxu0 0
        %1481 = vmatprep.mubr.bf16.mxu0 0
        %1482 = vmatmul.mubr.bf16.gmra.mxu0 %v1447
        %v1483 = vpop.f32.mrf.mxu0
        %v1484 = vadd.f32 0.0, %v1483
        %v1485 = vpop.f32.mrf.mxu0
        %v1486 = vpop.f32.mrf.mxu0
        %v1487 = vpop.f32.mrf.mxu0
        %1488 = vdwg.mxu0
        %1490 = vrot.lane.b32.xlu0 %v1169, 96
        %v1491 = vpop.permute.xlu0 %1490
        %v1494 = vsel %vm911, %v1393, 0
        %1496 = vmatprep.subr.bf16.mxu0 0
        %1497 = vmatpush1.bf16.msra.mxu0 0
        %1498 = vmatprep.subr.bf16.mxu0 0
        %1499 = vmatpush1.bf16.msra.mxu0 0
        %1500 = vmatprep.subr.bf16.mxu0 0
        %1501 = vmatpush1.bf16.msra.mxu0 0
        %1502 = vmatprep.subr.bf16.mxu0 0
        %1503 = vmatpush1.bf16.msra.mxu0 0
        %1504 = vmatprep.subr.bf16.mxu0 0
        %1505 = vmatpush1.bf16.msra.mxu0 0
        %1506 = vmatprep.subr.bf16.mxu0 0
        %1507 = vmatpush1.bf16.msra.mxu0 0
        %1508 = vmatprep.subr.bf16.mxu0 0
        %1509 = vmatpush1.bf16.msra.mxu0 0
        %1510 = vmatprep.subr.bf16.mxu0 0
        %1511 = vmatpush1.bf16.msra.mxu0 %v1491
        %1512 = vmatprep.subr.bf16.mxu0 0
        %1513 = vmatpush2.bf16.msra.mxu0 0
        %1514 = vmatprep.subr.bf16.mxu0 0
        %1515 = vmatpush2.bf16.msra.mxu0 0
        %1516 = vmatprep.subr.bf16.mxu0 0
        %1517 = vmatpush2.bf16.msra.mxu0 0
        %1518 = vmatprep.subr.bf16.mxu0 0
        %1519 = vmatpush2.bf16.msra.mxu0 0
        %1520 = vmatprep.subr.bf16.mxu0 0
        %1521 = vmatpush2.bf16.msra.mxu0 0
        %1522 = vmatprep.subr.bf16.mxu0 0
        %1523 = vmatpush2.bf16.msra.mxu0 0
        %1524 = vmatprep.subr.bf16.mxu0 0
        %1525 = vmatpush2.bf16.msra.mxu0 0
        %1526 = vmatprep.subr.bf16.mxu0 0
        %1527 = vmatpush2.bf16.msra.mxu0 0
        %1528 = vmatprep.mubr.bf16.mxu0 0
        %1529 = vmatmul.mubr.bf16.gmra.mxu0 %v1494
        %v1530 = vpop.f32.mrf.mxu0
        %v1531 = vadd.f32 0.0, %v1530
        %v1532 = vpop.f32.mrf.mxu0
        %v1533 = vpop.f32.mrf.mxu0
        %v1534 = vpop.f32.mrf.mxu0
        %1535 = vdwg.mxu0
        %1537 = vrot.lane.b32.xlu0 %v1170, 96
        %v1538 = vpop.permute.xlu0 %1537
        %v1541 = vsel %vm911, %v1394, 0
        %1543 = vmatprep.subr.bf16.mxu0 0
        %1544 = vmatpush1.bf16.msra.mxu0 0
        %1545 = vmatprep.subr.bf16.mxu0 0
        %1546 = vmatpush1.bf16.msra.mxu0 0
        %1547 = vmatprep.subr.bf16.mxu0 0
        %1548 = vmatpush1.bf16.msra.mxu0 0
        %1549 = vmatprep.subr.bf16.mxu0 0
        %1550 = vmatpush1.bf16.msra.mxu0 0
        %1551 = vmatprep.subr.bf16.mxu0 0
        %1552 = vmatpush1.bf16.msra.mxu0 0
        %1553 = vmatprep.subr.bf16.mxu0 0
        %1554 = vmatpush1.bf16.msra.mxu0 0
        %1555 = vmatprep.subr.bf16.mxu0 0
        %1556 = vmatpush1.bf16.msra.mxu0 0
        %1557 = vmatprep.subr.bf16.mxu0 0
        %1558 = vmatpush1.bf16.msra.mxu0 %v1538
        %1559 = vmatprep.subr.bf16.mxu0 0
        %1560 = vmatpush2.bf16.msra.mxu0 0
        %1561 = vmatprep.subr.bf16.mxu0 0
        %1562 = vmatpush2.bf16.msra.mxu0 0
        %1563 = vmatprep.subr.bf16.mxu0 0
        %1564 = vmatpush2.bf16.msra.mxu0 0
        %1565 = vmatprep.subr.bf16.mxu0 0
        %1566 = vmatpush2.bf16.msra.mxu0 0
        %1567 = vmatprep.subr.bf16.mxu0 0
        %1568 = vmatpush2.bf16.msra.mxu0 0
        %1569 = vmatprep.subr.bf16.mxu0 0
        %1570 = vmatpush2.bf16.msra.mxu0 0
        %1571 = vmatprep.subr.bf16.mxu0 0
        %1572 = vmatpush2.bf16.msra.mxu0 0
        %1573 = vmatprep.subr.bf16.mxu0 0
        %1574 = vmatpush2.bf16.msra.mxu0 0
        %1575 = vmatprep.mubr.bf16.mxu0 0
        %1576 = vmatmul.mubr.bf16.gmra.mxu0 %v1541
        %v1577 = vpop.f32.mrf.mxu0
        %v1578 = vadd.f32 0.0, %v1577
        %v1579 = vpop.f32.mrf.mxu0
        %v1580 = vpop.f32.mrf.mxu0
        %v1581 = vpop.f32.mrf.mxu0
        %1582 = vdwg.mxu0
        %v1583 = vrcp.pop %v1381
        %v1584 = vrcp.pop %v1384
        %v1585 = vrcp.pop %v1387
        %v1586 = vrcp.pop %v1390
        %v1587 = vmul.f32 %v1437, %v1583
        %v1588 = vmul.f32 %v1484, %v1584
        %v1589 = vmul.f32 %v1531, %v1585
        %v1590 = vmul.f32 %v1578, %v1586
        %1592 = vrot.lane.b32.xlu0 %v1588, 8
        %v1593 = vpop.permute.xlu0 %1592
        %1596 = vrot.lane.b32.xlu0 %v1589, 16
        %v1597 = vpop.permute.xlu0 %1596
        %1600 = vrot.lane.b32.xlu0 %v1590, 24
        %v1601 = vpop.permute.xlu0 %1600
        %v1603 = vsel %vm463, %v1587, %v1593
        %v1604 = vsel %vm911, %v1603, %v1597
        %v1605 = vsel %vm913, %v1604, %v1601
        %v1606 = vpack.c.bf16 %v1605, %v1605
        %v1607 = vld [vmem:[%s6] sm:$0xf]
        %v1608 = vld [vmem:[%s6 + $0x4] sm:$0xf]
        %v1609 = vld [vmem:[%s6 + $0x8] sm:$0xf]
        %v1610 = vld [vmem:[%s6 + $0xc] sm:$0xf]
        %v1611 = vlaneseq
        %v1612 = vshrl.u32 %v1611, 7
        %v1613 = vsub.s32 4, %v1612
        %v1614 = vrot.slane %v379, %v1613
        %v1619 = vunpack.c.l.b16 %v1607
        %v1620 = vunpack.c.l.b16 %v1608
        %v1621 = vunpack.c.l.b16 %v1609
        %v1622 = vunpack.c.l.b16 %v1610
        %v1623 = vpack.c.b16 %v1620, %v1619
        %v1624 = vpack.c.b16 %v1622, %v1621
        %v1628 = vsel %vm402, %v1606, 0
        %1630 = vmatprep.subr.bf16.mxu0 0
        %1631 = vmatpush1.bf16.msra.mxu0 0
        %1632 = vmatprep.subr.bf16.mxu0 0
        %1633 = vmatpush1.bf16.msra.mxu0 0
        %1634 = vmatprep.subr.bf16.mxu0 0
        %1635 = vmatpush1.bf16.msra.mxu0 0
        %1636 = vmatprep.subr.bf16.mxu0 0
        %1637 = vmatpush1.bf16.msra.mxu0 0
        %1638 = vmatprep.subr.bf16.mxu0 0
        %1639 = vmatpush1.bf16.msra.mxu0 0
        %1640 = vmatprep.subr.bf16.mxu0 0
        %1641 = vmatpush1.bf16.msra.mxu0 0
        %1642 = vmatprep.subr.bf16.mxu0 0
        %1643 = vmatpush1.bf16.msra.mxu0 %v1624
        %1644 = vmatprep.subr.bf16.mxu0 0
        %1645 = vmatpush1.bf16.msra.mxu0 %v1623
        %1646 = vmatprep.subr.bf16.mxu0 0
        %1647 = vmatpush2.bf16.msra.mxu0 0
        %1648 = vmatprep.subr.bf16.mxu0 0
        %1649 = vmatpush2.bf16.msra.mxu0 0
        %1650 = vmatprep.subr.bf16.mxu0 0
        %1651 = vmatpush2.bf16.msra.mxu0 0
        %1652 = vmatprep.subr.bf16.mxu0 0
        %1653 = vmatpush2.bf16.msra.mxu0 0
        %1654 = vmatprep.subr.bf16.mxu0 0
        %1655 = vmatpush2.bf16.msra.mxu0 0
        %1656 = vmatprep.subr.bf16.mxu0 0
        %1657 = vmatpush2.bf16.msra.mxu0 0
        %1658 = vmatprep.subr.bf16.mxu0 0
        %1659 = vmatpush2.bf16.msra.mxu0 0
        %1660 = vmatprep.subr.bf16.mxu0 0
        %1661 = vmatpush2.bf16.msra.mxu0 0
        %1662 = vmatprep.mubr.bf16.mxu0 0
        %1663 = vmatmul.mubr.bf16.gmra.mxu0 %v1628
        %v1664 = vpop.f32.mrf.mxu0
        %v1665 = vadd.f32 %v1614, %v1664
        %v1666 = vpop.f32.mrf.mxu0
        %v1667 = vpop.f32.mrf.mxu0
        %v1668 = vpop.f32.mrf.mxu0
        %1669 = vdwg.mxu0
        %v1670 = vadd.f32 %v1003, %v1665
        %v1671 = vsel %vm402, %v1670, 0.0
        %1672 = vadd.xlane.f32.xlu0 %v1671
        %v1673 = vpop.xlane.xlu0 %1672
        %v1674 = vmul.f32 %v1673, %v983
        %v1675 = vsub.f32 %v1670, %v1674
        %v1676 = vmul.f32 %v1675, %v1675
        %v1677 = vsel %vm402, %v1676, 0.0
        %1678 = vadd.xlane.f32.xlu0 %v1677
        %v1679 = vpop.xlane.xlu0 %1678
        %v1680 = vmul.f32 %v1679, %v983
        %v1681 = vadd.f32 %v1680, 1e-05
        %v1682 = vrsqrt.pop %v1681
        %v1683 = vmul.f32 %v1675, %v1682
        %v1684 = vlaneseq
        %v1685 = vshrl.u32 %v1684, 7
        %v1686 = vsub.s32 7, %v1685
        %v1687 = vrot.slane %v379, %v1686
        %v1688 = vmul.f32 %v1683, %v1687
        %v1689 = vlaneseq
        %v1690 = vshrl.u32 %v1689, 7
        %v1691 = vsub.s32 0, %v1690
        %v1692 = vrot.slane %v380, %v1691
        %v1693 = vadd.f32 %v1688, %v1692
        %v1694 = vpack.c.bf16 %v1693, %v1693
        %v1695 = vld [vmem:[%s7] sm:$0xf]
        %v1696 = vld [vmem:[%s7 + $0x4] sm:$0xf]
        %v1697 = vld [vmem:[%s7 + $0x8] sm:$0xf]
        %v1698 = vld [vmem:[%s7 + $0xc] sm:$0xf]
        %v1699 = vlaneseq
        %v1700 = vshrl.u32 %v1699, 7
        %v1701 = vsub.s32 3, %v1700
        %v1702 = vrot.slane %v380, %v1701
        %v1707 = vunpack.c.l.b16 %v1695
        %v1708 = vunpack.c.l.b16 %v1696
        %v1709 = vunpack.c.l.b16 %v1697
        %v1710 = vunpack.c.l.b16 %v1698
        %v1711 = vpack.c.b16 %v1708, %v1707
        %v1712 = vpack.c.b16 %v1710, %v1709
        %v1716 = vsel %vm402, %v1694, 0
        %1718 = vmatprep.subr.bf16.mxu0 0
        %1719 = vmatpush1.bf16.msra.mxu0 0
        %1720 = vmatprep.subr.bf16.mxu0 0
        %1721 = vmatpush1.bf16.msra.mxu0 0
        %1722 = vmatprep.subr.bf16.mxu0 0
        %1723 = vmatpush1.bf16.msra.mxu0 0
        %1724 = vmatprep.subr.bf16.mxu0 0
        %1725 = vmatpush1.bf16.msra.mxu0 0
        %1726 = vmatprep.subr.bf16.mxu0 0
        %1727 = vmatpush1.bf16.msra.mxu0 0
        %1728 = vmatprep.subr.bf16.mxu0 0
        %1729 = vmatpush1.bf16.msra.mxu0 0
        %1730 = vmatprep.subr.bf16.mxu0 0
        %1731 = vmatpush1.bf16.msra.mxu0 %v1712
        %1732 = vmatprep.subr.bf16.mxu0 0
        %1733 = vmatpush1.bf16.msra.mxu0 %v1711
        %1734 = vmatprep.subr.bf16.mxu0 0
        %1735 = vmatpush2.bf16.msra.mxu0 0
        %1736 = vmatprep.subr.bf16.mxu0 0
        %1737 = vmatpush2.bf16.msra.mxu0 0
        %1738 = vmatprep.subr.bf16.mxu0 0
        %1739 = vmatpush2.bf16.msra.mxu0 0
        %1740 = vmatprep.subr.bf16.mxu0 0
        %1741 = vmatpush2.bf16.msra.mxu0 0
        %1742 = vmatprep.subr.bf16.mxu0 0
        %1743 = vmatpush2.bf16.msra.mxu0 0
        %1744 = vmatprep.subr.bf16.mxu0 0
        %1745 = vmatpush2.bf16.msra.mxu0 0
        %1746 = vmatprep.subr.bf16.mxu0 0
        %1747 = vmatpush2.bf16.msra.mxu0 0
        %1748 = vmatprep.subr.bf16.mxu0 0
        %1749 = vmatpush2.bf16.msra.mxu0 0
        %1750 = vmatprep.mubr.bf16.mxu0 0
        %1751 = vmatmul.mubr.bf16.gmra.mxu0 %v1716
        %v1752 = vpop.f32.mrf.mxu0
        %v1753 = vadd.f32 %v1702, %v1752
        %v1754 = vpop.f32.mrf.mxu0
        %v1755 = vpop.f32.mrf.mxu0
        %v1756 = vpop.f32.mrf.mxu0
        %1757 = vdwg.mxu0
        %v1758 = vmax.f32 %v1753, 0.0
        %v1759 = vpack.c.bf16 %v1758, %v1758
        %v1760 = vld [vmem:[%s8] sm:$0xf]
        %v1761 = vld [vmem:[%s8 + $0x4] sm:$0xf]
        %v1762 = vld [vmem:[%s8 + $0x8] sm:$0xf]
        %v1763 = vld [vmem:[%s8 + $0xc] sm:$0xf]
        %v1764 = vld [vmem:[%s8 + $0x10] sm:$0xf]
        %v1765 = vld [vmem:[%s8 + $0x14] sm:$0xf]
        %v1766 = vld [vmem:[%s8 + $0x18] sm:$0xf]
        %v1767 = vld [vmem:[%s8 + $0x1c] sm:$0xf]
        %v1768 = vlaneseq
        %v1769 = vshrl.u32 %v1768, 7
        %v1770 = vsub.s32 4, %v1769
        %v1771 = vrot.slane %v380, %v1770
        %v1780 = vunpack.c.l.b16 %v1760
        %v1781 = vunpack.c.l.b16 %v1761
        %v1782 = vunpack.c.l.b16 %v1762
        %v1783 = vunpack.c.l.b16 %v1763
        %v1784 = vunpack.c.l.b16 %v1764
        %v1785 = vunpack.c.l.b16 %v1765
        %v1786 = vunpack.c.l.b16 %v1766
        %v1787 = vunpack.c.l.b16 %v1767
        %v1788 = vpack.c.b16 %v1781, %v1780
        %v1789 = vpack.c.b16 %v1783, %v1782
        %v1790 = vpack.c.b16 %v1785, %v1784
        %v1791 = vpack.c.b16 %v1787, %v1786
        %vm1796 = vcmask 523264
        %v1798 = vsel %vm1796, %v1759, 0
        %1800 = vmatprep.subr.bf16.mxu0 0
        %1801 = vmatpush1.bf16.msra.mxu0 0
        %1802 = vmatprep.subr.bf16.mxu0 0
        %1803 = vmatpush1.bf16.msra.mxu0 0
        %1804 = vmatprep.subr.bf16.mxu0 0
        %1805 = vmatpush1.bf16.msra.mxu0 0
        %1806 = vmatprep.subr.bf16.mxu0 0
        %1807 = vmatpush1.bf16.msra.mxu0 0
        %1808 = vmatprep.subr.bf16.mxu0 0
        %1809 = vmatpush1.bf16.msra.mxu0 %v1791
        %1810 = vmatprep.subr.bf16.mxu0 0
        %1811 = vmatpush1.bf16.msra.mxu0 %v1790
        %1812 = vmatprep.subr.bf16.mxu0 0
        %1813 = vmatpush1.bf16.msra.mxu0 %v1789
        %1814 = vmatprep.subr.bf16.mxu0 0
        %1815 = vmatpush1.bf16.msra.mxu0 %v1788
        %1816 = vmatprep.subr.bf16.mxu0 0
        %1817 = vmatpush2.bf16.msra.mxu0 0
        %1818 = vmatprep.subr.bf16.mxu0 0
        %1819 = vmatpush2.bf16.msra.mxu0 0
        %1820 = vmatprep.subr.bf16.mxu0 0
        %1821 = vmatpush2.bf16.msra.mxu0 0
        %1822 = vmatprep.subr.bf16.mxu0 0
        %1823 = vmatpush2.bf16.msra.mxu0 0
        %1824 = vmatprep.subr.bf16.mxu0 0
        %1825 = vmatpush2.bf16.msra.mxu0 0
        %1826 = vmatprep.subr.bf16.mxu0 0
        %1827 = vmatpush2.bf16.msra.mxu0 0
        %1828 = vmatprep.subr.bf16.mxu0 0
        %1829 = vmatpush2.bf16.msra.mxu0 0
        %1830 = vmatprep.subr.bf16.mxu0 0
        %1831 = vmatpush2.bf16.msra.mxu0 0
        %1832 = vmatprep.mubr.bf16.mxu0 0
        %1833 = vmatmul.mubr.bf16.gmra.mxu0 %v1798
        %v1834 = vpop.f32.mrf.mxu0
        %v1835 = vadd.f32 %v1771, %v1834
        %v1836 = vpop.f32.mrf.mxu0
        %v1837 = vpop.f32.mrf.mxu0
        %v1838 = vpop.f32.mrf.mxu0
        %1839 = vdwg.mxu0
        %v1840 = vadd.f32 %v1693, %v1835
        %v1841 = vsel %vm402, %v1840, 0.0
        %1842 = vadd.xlane.f32.xlu0 %v1841
        %v1843 = vpop.xlane.xlu0 %1842
        %v1844 = vmul.f32 %v1843, %v983
        %v1845 = vsub.f32 %v1840, %v1844
        %v1846 = vmul.f32 %v1845, %v1845
        %v1847 = vsel %vm402, %v1846, 0.0
        %1848 = vadd.xlane.f32.xlu0 %v1847
        %v1849 = vpop.xlane.xlu0 %1848
        %v1850 = vmul.f32 %v1849, %v983
        %v1851 = vadd.f32 %v1850, 1e-05
        %v1852 = vrsqrt.pop %v1851
        %v1853 = vmul.f32 %v1845, %v1852
        %v1854 = vlaneseq
        %v1855 = vshrl.u32 %v1854, 7
        %v1856 = vsub.s32 1, %v1855
        %v1857 = vrot.slane %v380, %v1856
        %v1858 = vmul.f32 %v1853, %v1857
        %v1859 = vlaneseq
        %v1860 = vshrl.u32 %v1859, 7
        %v1861 = vsub.s32 2, %v1860
        %v1862 = vrot.slane %v380, %v1861
        %v1863 = vadd.f32 %v1858, %v1862
        %1864 = vst.msk [vmem:[%s365] sm:$0xff] %vm402, %v1863
        %s1865 = sand.u32 %s252, 1
        %s1866 = scalar_lea.sflag [#allocation3], %s1865
        %s1867 = sand.u32 %s252, 1
        %s1868 = smul.addr %s1867, 8
        %s1869 = scalar_lea.vmem [#allocation2], %s1868
        // Predicated region
        $region61: #{transformer_decoder_layer.1} parent=59 // pred_check
          %p1870 = pneg %p262
        $region62: #{transformer_decoder_layer.1} parent=59 // pred_check_branch
          %1872 = sbr.rel (%p1870) target = $region64
        $region63: #{transformer_decoder_layer.1} parent=59 // pred_region
          %s1874 = ssub.s32 128, 128
          %1875 = vsyncadd %s1866, %s1874
          %s1876 = smul.addr %s24, 128
          %s1877 = scalar_lea.hbm %s10, %s1876
          %s1879 = sshll.u32 %s1869, 4
          %s1880 = int_to_ptr.vmem [resolvable:$true] %s1879
          %1882 = dma.vmem_to_hbm [thread:$0]  %s1880, 128, %s1877, %s1866
        $region64: #{transformer_decoder_layer.1} parent=59 // pred_fallthru
          _
      $region60: #{transformer_decoder_layer.1} parent=5 // pred_fallthru
        _
      %p1883 = scmp.le.s32.totalorder 2, %s19
      // Predicated region
      $region65: #{transformer_decoder_layer.1} parent=5 // pred_check
        %p1884 = pneg %p1883
      $region66: #{transformer_decoder_layer.1} parent=5 // pred_check_branch
        %1886 = sbr.rel (%p1884) target = $region68
      $region67: #{transformer_decoder_layer.1} parent=5 // pred_region
        %s1887 = ssub.s32 %s19, 2
        // Predicated region
        $region69: #{transformer_decoder_layer.1} parent=67 // pred_check
          %p1888 = pneg %p268
        $region70: #{transformer_decoder_layer.1} parent=67 // pred_check_branch
          %1890 = sbr.rel (%p1888) target = $region72
        $region71: #{transformer_decoder_layer.1} parent=67 // pred_region
          %s1891 = sand.u32 %s253, 1
          %s1892 = scalar_lea.sflag [#allocation3], %s1891
          %s1893 = sand.u32 %s253, 1
          %s1894 = smul.addr %s1893, 8
          %s1895 = scalar_lea.vmem [#allocation2], %s1894
          %1896 = dma.done %s1892, 128
        $region72: #{transformer_decoder_layer.1} parent=67 // pred_fallthru
          _
      $region68: #{transformer_decoder_layer.1} parent=5 // pred_fallthru
        _
    $region6: #{transformer_decoder_layer.1} parent=1 // loop_footer
      %s23 = sadd.s32 1, %s19
    $region7: #{transformer_decoder_layer.1} parent=1 // loop_footer_branch
      %18 = sbr.rel target = $region3
    $region8: #{transformer_decoder_layer.1} parent=1 // loop_exit
      _
    %1897 = vsyncpa [#allocation3], 1
    %s1898 = scalar_lea.sflag [#allocation3], 1
    %1899 = vsyncpa %s1898, 1

</llo_original>
